<compile_context>
chip_gen: v7x
topology: tpu7x:2x2x1
jax: 0.10.0
libtpu: 0.0.40
codegen_flags: <defaults>
</compile_context>

<pallas_src>
import jax
import jax.numpy as jnp
from jax.experimental import pallas as pl
from jax.experimental.pallas import tpu as pltpu


def generator_kernel(z_ref, wih_ref, whh_ref, b_ref, wlin_ref, blin_ref, out_ref):
    # z_ref:   (T, Bt, D)   time-major batch block
    # wih_ref: (D, 4H)      input->gates weights  (g block pre-scaled by 2)
    # whh_ref: (H, 4H)      hidden->gates weights (g block pre-scaled by 2)
    # b_ref:   (1, 4H)      combined bias b_ih+b_hh (g block pre-scaled by 2)
    # wlin_ref:(H, S), blin_ref:(1, S)
    # out_ref: (T, Bt, S)
    T, Bt, D = z_ref.shape
    H = whh_ref.shape[0]
    S = wlin_ref.shape[1]

    # ---- Hoisted input projection: one matmul, one bias broadcast ----------
    z_flat = z_ref[...].reshape(T * Bt, D)
    gates_x = (
        jnp.dot(z_flat, wih_ref[...], preferred_element_type=jnp.float32)
        + b_ref[...]
    )  # (T*Bt, 4H)

    whh = whh_ref[...]  # load once, reuse across the unrolled loop

    h = jnp.zeros((Bt, H), jnp.float32)
    c = jnp.zeros((Bt, H), jnp.float32)
    hs = []

    # ---- Recurrence: fully unrolled (T static); only h @ W_hh per step -----
    for t in range(T):
        gates = gates_x[t * Bt:(t + 1) * Bt, :] + jnp.dot(
            h, whh, preferred_element_type=jnp.float32
        )  # (Bt, 4H)

        # One full-row sigmoid; tanh for the g block via 2*sigmoid(2x)-1
        # (the 2x is baked into the weights/bias in the wrapper).
        sg = jax.nn.sigmoid(gates)
        i_g = sg[:, 0 * H:1 * H]
        f_g = sg[:, 1 * H:2 * H]
        g_g = 2.0 * sg[:, 2 * H:3 * H] - 1.0
        o_g = sg[:, 3 * H:4 * H]

        c = f_g * c + i_g * g_g
        h = o_g * jnp.tanh(c)
        hs.append(h)

    # ---- Deferred output projection + sigmoid, single dense store ----------
    h_all = jnp.stack(hs, axis=0).reshape(T * Bt, H)
    y = jax.nn.sigmoid(
        jnp.dot(h_all, wlin_ref[...], preferred_element_type=jnp.float32)
        + blin_ref[...]
    )  # (T*Bt, S)
    out_ref[...] = y.reshape(T, Bt, S)


def _pick_batch_block(B):
    # Batch blocks must be a multiple of 8 (sublane) or the full batch.
    if B % 8 == 0:
        for cand in (128, 64, 32, 16, 8):
            if B % cand == 0:
                return cand
    return B


def generator_forward(z, params):
    """params = (w_ih (4H,D), w_hh (4H,H), b_ih (4H,), b_hh (4H,),
                 w_lin (S,H), b_lin (S,)) — PyTorch parameter shapes."""
    w_ih, w_hh, b_ih, b_hh, w_lin, b_lin = params
    B, T, D = z.shape
    H = w_hh.shape[1]
    S = w_lin.shape[0]

    # Glue: transposed weights for plain (rows, K)@(K, N) matmuls; pre-scale
    # the g-gate block by 2 so tanh(x) = 2*sigmoid(2x) - 1 inside the kernel.
    g_scale = jnp.concatenate(
        [jnp.ones((2 * H,)), 2.0 * jnp.ones((H,)), jnp.ones((H,))]
    ).astype(jnp.float32)  # (4H,) — scales columns of the gate dimension

    wih_t = jnp.asarray(w_ih.T, jnp.float32) * g_scale[None, :]          # (D, 4H)
    whh_t = jnp.asarray(w_hh.T, jnp.float32) * g_scale[None, :]          # (H, 4H)
    b = (jnp.asarray(b_ih + b_hh, jnp.float32) * g_scale)[None, :]       # (1, 4H)
    wlin_t = jnp.asarray(w_lin.T, jnp.float32)                           # (H, S)
    blin = jnp.asarray(b_lin, jnp.float32)[None, :]                      # (1, S)

    # Time-major layout so the kernel indexes the leading axis (free offset).
    z_tm = jnp.transpose(jnp.asarray(z, jnp.float32), (1, 0, 2))         # (T, B, D)

    Bt = _pick_batch_block(B)
    grid = (B // Bt,)

    out_tm = pl.pallas_call(
        generator_kernel,
        out_shape=jax.ShapeDtypeStruct((T, B, S), jnp.float32),
        grid=grid,
        in_specs=[
            pl.BlockSpec((T, Bt, D), lambda b: (0, b, 0)),
            pl.BlockSpec((D, 4 * H), lambda b: (0, 0)),
            pl.BlockSpec((H, 4 * H), lambda b: (0, 0)),
            pl.BlockSpec((1, 4 * H), lambda b: (0, 0)),
            pl.BlockSpec((H, S), lambda b: (0, 0)),
            pl.BlockSpec((1, S), lambda b: (0, 0)),
        ],
        out_specs=pl.BlockSpec((T, Bt, S), lambda b: (0, b, 0)),
        compiler_params=pltpu.CompilerParams(
            dimension_semantics=("parallel",),  # batch is the only parallel axis
        ),
    )(z_tm, wih_t, whh_t, b, wlin_t, blin)

    # Back to batch-first (B, T, S), matching the PyTorch module.
    return jnp.transpose(out_tm, (1, 0, 2))


def generator_ref(z, params):
    """Pure-JAX reference matching PyTorch LSTM + Linear + sigmoid semantics."""
    w_ih, w_hh, b_ih, b_hh, w_lin, b_lin = params
    B, T, D = z.shape
    H = w_hh.shape[1]
    h = jnp.zeros((B, H), jnp.float32)
    c = jnp.zeros((B, H), jnp.float32)
    outs = []
    for t in range(T):
        gates = z[:, t, :] @ w_ih.T + h @ w_hh.T + b_ih + b_hh
        i_g, f_g, g_g, o_g = jnp.split(gates, 4, axis=-1)
        i_g = jax.nn.sigmoid(i_g)
        f_g = jax.nn.sigmoid(f_g)
        g_g = jnp.tanh(g_g)
        o_g = jax.nn.sigmoid(o_g)
        c = f_g * c + i_g * g_g
        h = o_g * jnp.tanh(c)
        outs.append(jax.nn.sigmoid(h @ w_lin.T + b_lin))
    return jnp.stack(outs, axis=1)


if __name__ == "__main__":
    # Small shapes consistent with the module's forward pass.
    batch, seq_len, input_dim, hidden_dim = 2, 8, 4, 32

    key = jax.random.PRNGKey(0)
    k = 1.0 / jnp.sqrt(hidden_dim)       # PyTorch default init scale
    ks = jax.random.split(key, 7)
    w_ih = jax.random.uniform(ks[0], (4 * hidden_dim, input_dim), minval=-k, maxval=k)
    w_hh = jax.random.uniform(ks[1], (4 * hidden_dim, hidden_dim), minval=-k, maxval=k)
    b_ih = jax.random.uniform(ks[2], (4 * hidden_dim,), minval=-k, maxval=k)
    b_hh = jax.random.uniform(ks[3], (4 * hidden_dim,), minval=-k, maxval=k)
    w_lin = jax.random.uniform(ks[4], (seq_len, hidden_dim), minval=-k, maxval=k)
    b_lin = jax.random.uniform(ks[5], (seq_len,), minval=-k, maxval=k)
    params = (w_ih, w_hh, b_ih, b_hh, w_lin, b_lin)

    z = jax.random.normal(ks[6], (batch, seq_len, input_dim), dtype=jnp.float32)

    out = generator_forward(z, params)
    out = jax.block_until_ready(out)

    ref = generator_ref(z, params)
    assert out.shape == (batch, seq_len, seq_len)
    assert jnp.allclose(out, ref, atol=1e-5, rtol=1e-5), "mismatch vs reference"

    print("KERNEL_OK")
</pallas_src>

<mosaic_0001>
module attributes {stable_mosaic.version = 11 : i64} {
  func.func @generator_kernel(%arg0: i32, %arg1: memref<8x2x4xf32, #tpu.memory_space<vmem>>, %arg2: memref<4x128xf32, #tpu.memory_space<vmem>>, %arg3: memref<32x128xf32, #tpu.memory_space<vmem>>, %arg4: memref<1x128xf32, #tpu.memory_space<vmem>>, %arg5: memref<32x8xf32, #tpu.memory_space<vmem>>, %arg6: memref<1x8xf32, #tpu.memory_space<vmem>>, %arg7: memref<8x2x8xf32, #tpu.memory_space<vmem>>) attributes {dimension_semantics = [#tpu.dimension_semantics<parallel>], iteration_bounds = array<i64: 1>, scalar_prefetch = 0 : i64, scratch_operands = 0 : i64, tpu.core_type = #tpu.core_type<tc>, window_params = [{transform_indices = @transform_0, window_bounds = array<i64: 8, 2, 4>}, {pipeline_mode = #tpu.pipeline_mode<synchronous>, transform_indices = @transform_1, window_bounds = array<i64: 4, 128>}, {pipeline_mode = #tpu.pipeline_mode<synchronous>, transform_indices = @transform_2, window_bounds = array<i64: 32, 128>}, {pipeline_mode = #tpu.pipeline_mode<synchronous>, transform_indices = @transform_3, window_bounds = array<i64: 1, 128>}, {pipeline_mode = #tpu.pipeline_mode<synchronous>, transform_indices = @transform_4, window_bounds = array<i64: 32, 8>}, {pipeline_mode = #tpu.pipeline_mode<synchronous>, transform_indices = @transform_5, window_bounds = array<i64: 1, 8>}, {transform_indices = @transform_6, window_bounds = array<i64: 8, 2, 8>}]} {
    %c0 = arith.constant 0 : index
    %c0_0 = arith.constant 0 : index
    %c0_1 = arith.constant 0 : index
    %0 = vector.load %arg1[%c0, %c0_0, %c0_1] : memref<8x2x4xf32, #tpu.memory_space<vmem>>, vector<8x2x4xf32>
    %1 = vector.shape_cast %0 : vector<8x2x4xf32> to vector<16x4xf32>
    %c0_2 = arith.constant 0 : index
    %c0_3 = arith.constant 0 : index
    %2 = vector.load %arg2[%c0_2, %c0_3] : memref<4x128xf32, #tpu.memory_space<vmem>>, vector<4x128xf32>
    %cst = arith.constant dense<0.000000e+00> : vector<16x128xf32>
    %3 = tpu.matmul %1, %2, %cst {dimension_numbers = #tpu.dot_dimension_numbers<[1], [0], [0], [1], [0, 0, 1, 1], [], []>} : vector<16x4xf32>, vector<4x128xf32>, vector<16x128xf32> -> vector<16x128xf32>
    %c0_4 = arith.constant 0 : index
    %c0_5 = arith.constant 0 : index
    %4 = vector.load %arg4[%c0_4, %c0_5] : memref<1x128xf32, #tpu.memory_space<vmem>>, vector<1x128xf32>
    %5 = vector.broadcast %4 : vector<1x128xf32> to vector<16x128xf32>
    %6 = arith.addf %3, %5 : vector<16x128xf32>
    %c0_6 = arith.constant 0 : index
    %c0_7 = arith.constant 0 : index
    %7 = vector.load %arg3[%c0_6, %c0_7] : memref<32x128xf32, #tpu.memory_space<vmem>>, vector<32x128xf32>
    %cst_8 = arith.constant 0.000000e+00 : f32
    %8 = vector.broadcast %cst_8 : f32 to vector<2x32xf32>
    %cst_9 = arith.constant 0.000000e+00 : f32
    %9 = vector.broadcast %cst_9 : f32 to vector<2x32xf32>
    %10 = vector.extract_strided_slice %6 {offsets = [0, 0], sizes = [2, 128], strides = [1, 1]} : vector<16x128xf32> to vector<2x128xf32>
    %cst_10 = arith.constant dense<0.000000e+00> : vector<2x128xf32>
    %11 = tpu.matmul %8, %7, %cst_10 {dimension_numbers = #tpu.dot_dimension_numbers<[1], [0], [0], [1], [0, 0, 1, 1], [], []>} : vector<2x32xf32>, vector<32x128xf32>, vector<2x128xf32> -> vector<2x128xf32>
    %12 = arith.addf %10, %11 : vector<2x128xf32>
    %13 = arith.negf %12 : vector<2x128xf32>
    %14 = math.exp %13 : vector<2x128xf32>
    %cst_11 = arith.constant 1.000000e+00 : f32
    %15 = vector.broadcast %cst_11 : f32 to vector<2x128xf32>
    %16 = arith.addf %15, %14 : vector<2x128xf32>
    %17 = arith.divf %15, %16 : vector<2x128xf32>
    %18 = vector.extract_strided_slice %17 {offsets = [0, 0], sizes = [2, 32], strides = [1, 1]} : vector<2x128xf32> to vector<2x32xf32>
    %19 = vector.extract_strided_slice %17 {offsets = [0, 32], sizes = [2, 32], strides = [1, 1]} : vector<2x128xf32> to vector<2x32xf32>
    %20 = vector.extract_strided_slice %17 {offsets = [0, 64], sizes = [2, 32], strides = [1, 1]} : vector<2x128xf32> to vector<2x32xf32>
    %cst_12 = arith.constant 2.000000e+00 : f32
    %21 = vector.broadcast %cst_12 : f32 to vector<2x32xf32>
    %22 = arith.mulf %21, %20 : vector<2x32xf32>
    %cst_13 = arith.constant 1.000000e+00 : f32
    %23 = vector.broadcast %cst_13 : f32 to vector<2x32xf32>
    %24 = arith.subf %22, %23 : vector<2x32xf32>
    %25 = vector.extract_strided_slice %17 {offsets = [0, 96], sizes = [2, 32], strides = [1, 1]} : vector<2x128xf32> to vector<2x32xf32>
    %26 = arith.mulf %19, %9 : vector<2x32xf32>
    %27 = arith.mulf %18, %24 : vector<2x32xf32>
    %28 = arith.addf %26, %27 : vector<2x32xf32>
    %29 = math.tanh %28 : vector<2x32xf32>
    %30 = arith.mulf %25, %29 : vector<2x32xf32>
    %31 = vector.extract_strided_slice %6 {offsets = [2, 0], sizes = [2, 128], strides = [1, 1]} : vector<16x128xf32> to vector<2x128xf32>
    %cst_14 = arith.constant dense<0.000000e+00> : vector<2x128xf32>
    %32 = tpu.matmul %30, %7, %cst_14 {dimension_numbers = #tpu.dot_dimension_numbers<[1], [0], [0], [1], [0, 0, 1, 1], [], []>} : vector<2x32xf32>, vector<32x128xf32>, vector<2x128xf32> -> vector<2x128xf32>
    %33 = arith.addf %31, %32 : vector<2x128xf32>
    %34 = arith.negf %33 : vector<2x128xf32>
    %35 = math.exp %34 : vector<2x128xf32>
    %cst_15 = arith.constant 1.000000e+00 : f32
    %36 = vector.broadcast %cst_15 : f32 to vector<2x128xf32>
    %37 = arith.addf %36, %35 : vector<2x128xf32>
    %38 = arith.divf %36, %37 : vector<2x128xf32>
    %39 = vector.extract_strided_slice %38 {offsets = [0, 0], sizes = [2, 32], strides = [1, 1]} : vector<2x128xf32> to vector<2x32xf32>
    %40 = vector.extract_strided_slice %38 {offsets = [0, 32], sizes = [2, 32], strides = [1, 1]} : vector<2x128xf32> to vector<2x32xf32>
    %41 = vector.extract_strided_slice %38 {offsets = [0, 64], sizes = [2, 32], strides = [1, 1]} : vector<2x128xf32> to vector<2x32xf32>
    %cst_16 = arith.constant 2.000000e+00 : f32
    %42 = vector.broadcast %cst_16 : f32 to vector<2x32xf32>
    %43 = arith.mulf %42, %41 : vector<2x32xf32>
    %cst_17 = arith.constant 1.000000e+00 : f32
    %44 = vector.broadcast %cst_17 : f32 to vector<2x32xf32>
    %45 = arith.subf %43, %44 : vector<2x32xf32>
    %46 = vector.extract_strided_slice %38 {offsets = [0, 96], sizes = [2, 32], strides = [1, 1]} : vector<2x128xf32> to vector<2x32xf32>
    %47 = arith.mulf %40, %28 : vector<2x32xf32>
    %48 = arith.mulf %39, %45 : vector<2x32xf32>
    %49 = arith.addf %47, %48 : vector<2x32xf32>
    %50 = math.tanh %49 : vector<2x32xf32>
    %51 = arith.mulf %46, %50 : vector<2x32xf32>
    %52 = vector.extract_strided_slice %6 {offsets = [4, 0], sizes = [2, 128], strides = [1, 1]} : vector<16x128xf32> to vector<2x128xf32>
    %cst_18 = arith.constant dense<0.000000e+00> : vector<2x128xf32>
    %53 = tpu.matmul %51, %7, %cst_18 {dimension_numbers = #tpu.dot_dimension_numbers<[1], [0], [0], [1], [0, 0, 1, 1], [], []>} : vector<2x32xf32>, vector<32x128xf32>, vector<2x128xf32> -> vector<2x128xf32>
    %54 = arith.addf %52, %53 : vector<2x128xf32>
    %55 = arith.negf %54 : vector<2x128xf32>
    %56 = math.exp %55 : vector<2x128xf32>
    %cst_19 = arith.constant 1.000000e+00 : f32
    %57 = vector.broadcast %cst_19 : f32 to vector<2x128xf32>
    %58 = arith.addf %57, %56 : vector<2x128xf32>
    %59 = arith.divf %57, %58 : vector<2x128xf32>
    %60 = vector.extract_strided_slice %59 {offsets = [0, 0], sizes = [2, 32], strides = [1, 1]} : vector<2x128xf32> to vector<2x32xf32>
    %61 = vector.extract_strided_slice %59 {offsets = [0, 32], sizes = [2, 32], strides = [1, 1]} : vector<2x128xf32> to vector<2x32xf32>
    %62 = vector.extract_strided_slice %59 {offsets = [0, 64], sizes = [2, 32], strides = [1, 1]} : vector<2x128xf32> to vector<2x32xf32>
    %cst_20 = arith.constant 2.000000e+00 : f32
    %63 = vector.broadcast %cst_20 : f32 to vector<2x32xf32>
    %64 = arith.mulf %63, %62 : vector<2x32xf32>
    %cst_21 = arith.constant 1.000000e+00 : f32
    %65 = vector.broadcast %cst_21 : f32 to vector<2x32xf32>
    %66 = arith.subf %64, %65 : vector<2x32xf32>
    %67 = vector.extract_strided_slice %59 {offsets = [0, 96], sizes = [2, 32], strides = [1, 1]} : vector<2x128xf32> to vector<2x32xf32>
    %68 = arith.mulf %61, %49 : vector<2x32xf32>
    %69 = arith.mulf %60, %66 : vector<2x32xf32>
    %70 = arith.addf %68, %69 : vector<2x32xf32>
    %71 = math.tanh %70 : vector<2x32xf32>
    %72 = arith.mulf %67, %71 : vector<2x32xf32>
    %73 = vector.extract_strided_slice %6 {offsets = [6, 0], sizes = [2, 128], strides = [1, 1]} : vector<16x128xf32> to vector<2x128xf32>
    %cst_22 = arith.constant dense<0.000000e+00> : vector<2x128xf32>
    %74 = tpu.matmul %72, %7, %cst_22 {dimension_numbers = #tpu.dot_dimension_numbers<[1], [0], [0], [1], [0, 0, 1, 1], [], []>} : vector<2x32xf32>, vector<32x128xf32>, vector<2x128xf32> -> vector<2x128xf32>
    %75 = arith.addf %73, %74 : vector<2x128xf32>
    %76 = arith.negf %75 : vector<2x128xf32>
    %77 = math.exp %76 : vector<2x128xf32>
    %cst_23 = arith.constant 1.000000e+00 : f32
    %78 = vector.broadcast %cst_23 : f32 to vector<2x128xf32>
    %79 = arith.addf %78, %77 : vector<2x128xf32>
    %80 = arith.divf %78, %79 : vector<2x128xf32>
    %81 = vector.extract_strided_slice %80 {offsets = [0, 0], sizes = [2, 32], strides = [1, 1]} : vector<2x128xf32> to vector<2x32xf32>
    %82 = vector.extract_strided_slice %80 {offsets = [0, 32], sizes = [2, 32], strides = [1, 1]} : vector<2x128xf32> to vector<2x32xf32>
    %83 = vector.extract_strided_slice %80 {offsets = [0, 64], sizes = [2, 32], strides = [1, 1]} : vector<2x128xf32> to vector<2x32xf32>
    %cst_24 = arith.constant 2.000000e+00 : f32
    %84 = vector.broadcast %cst_24 : f32 to vector<2x32xf32>
    %85 = arith.mulf %84, %83 : vector<2x32xf32>
    %cst_25 = arith.constant 1.000000e+00 : f32
    %86 = vector.broadcast %cst_25 : f32 to vector<2x32xf32>
    %87 = arith.subf %85, %86 : vector<2x32xf32>
    %88 = vector.extract_strided_slice %80 {offsets = [0, 96], sizes = [2, 32], strides = [1, 1]} : vector<2x128xf32> to vector<2x32xf32>
    %89 = arith.mulf %82, %70 : vector<2x32xf32>
    %90 = arith.mulf %81, %87 : vector<2x32xf32>
    %91 = arith.addf %89, %90 : vector<2x32xf32>
    %92 = math.tanh %91 : vector<2x32xf32>
    %93 = arith.mulf %88, %92 : vector<2x32xf32>
    %94 = vector.extract_strided_slice %6 {offsets = [8, 0], sizes = [2, 128], strides = [1, 1]} : vector<16x128xf32> to vector<2x128xf32>
    %cst_26 = arith.constant dense<0.000000e+00> : vector<2x128xf32>
    %95 = tpu.matmul %93, %7, %cst_26 {dimension_numbers = #tpu.dot_dimension_numbers<[1], [0], [0], [1], [0, 0, 1, 1], [], []>} : vector<2x32xf32>, vector<32x128xf32>, vector<2x128xf32> -> vector<2x128xf32>
    %96 = arith.addf %94, %95 : vector<2x128xf32>
    %97 = arith.negf %96 : vector<2x128xf32>
    %98 = math.exp %97 : vector<2x128xf32>
    %cst_27 = arith.constant 1.000000e+00 : f32
    %99 = vector.broadcast %cst_27 : f32 to vector<2x128xf32>
    %100 = arith.addf %99, %98 : vector<2x128xf32>
    %101 = arith.divf %99, %100 : vector<2x128xf32>
    %102 = vector.extract_strided_slice %101 {offsets = [0, 0], sizes = [2, 32], strides = [1, 1]} : vector<2x128xf32> to vector<2x32xf32>
    %103 = vector.extract_strided_slice %101 {offsets = [0, 32], sizes = [2, 32], strides = [1, 1]} : vector<2x128xf32> to vector<2x32xf32>
    %104 = vector.extract_strided_slice %101 {offsets = [0, 64], sizes = [2, 32], strides = [1, 1]} : vector<2x128xf32> to vector<2x32xf32>
    %cst_28 = arith.constant 2.000000e+00 : f32
    %105 = vector.broadcast %cst_28 : f32 to vector<2x32xf32>
    %106 = arith.mulf %105, %104 : vector<2x32xf32>
    %cst_29 = arith.constant 1.000000e+00 : f32
    %107 = vector.broadcast %cst_29 : f32 to vector<2x32xf32>
    %108 = arith.subf %106, %107 : vector<2x32xf32>
    %109 = vector.extract_strided_slice %101 {offsets = [0, 96], sizes = [2, 32], strides = [1, 1]} : vector<2x128xf32> to vector<2x32xf32>
    %110 = arith.mulf %103, %91 : vector<2x32xf32>
    %111 = arith.mulf %102, %108 : vector<2x32xf32>
    %112 = arith.addf %110, %111 : vector<2x32xf32>
    %113 = math.tanh %112 : vector<2x32xf32>
    %114 = arith.mulf %109, %113 : vector<2x32xf32>
    %115 = vector.extract_strided_slice %6 {offsets = [10, 0], sizes = [2, 128], strides = [1, 1]} : vector<16x128xf32> to vector<2x128xf32>
    %cst_30 = arith.constant dense<0.000000e+00> : vector<2x128xf32>
    %116 = tpu.matmul %114, %7, %cst_30 {dimension_numbers = #tpu.dot_dimension_numbers<[1], [0], [0], [1], [0, 0, 1, 1], [], []>} : vector<2x32xf32>, vector<32x128xf32>, vector<2x128xf32> -> vector<2x128xf32>
    %117 = arith.addf %115, %116 : vector<2x128xf32>
    %118 = arith.negf %117 : vector<2x128xf32>
    %119 = math.exp %118 : vector<2x128xf32>
    %cst_31 = arith.constant 1.000000e+00 : f32
    %120 = vector.broadcast %cst_31 : f32 to vector<2x128xf32>
    %121 = arith.addf %120, %119 : vector<2x128xf32>
    %122 = arith.divf %120, %121 : vector<2x128xf32>
    %123 = vector.extract_strided_slice %122 {offsets = [0, 0], sizes = [2, 32], strides = [1, 1]} : vector<2x128xf32> to vector<2x32xf32>
    %124 = vector.extract_strided_slice %122 {offsets = [0, 32], sizes = [2, 32], strides = [1, 1]} : vector<2x128xf32> to vector<2x32xf32>
    %125 = vector.extract_strided_slice %122 {offsets = [0, 64], sizes = [2, 32], strides = [1, 1]} : vector<2x128xf32> to vector<2x32xf32>
    %cst_32 = arith.constant 2.000000e+00 : f32
    %126 = vector.broadcast %cst_32 : f32 to vector<2x32xf32>
    %127 = arith.mulf %126, %125 : vector<2x32xf32>
    %cst_33 = arith.constant 1.000000e+00 : f32
    %128 = vector.broadcast %cst_33 : f32 to vector<2x32xf32>
    %129 = arith.subf %127, %128 : vector<2x32xf32>
    %130 = vector.extract_strided_slice %122 {offsets = [0, 96], sizes = [2, 32], strides = [1, 1]} : vector<2x128xf32> to vector<2x32xf32>
    %131 = arith.mulf %124, %112 : vector<2x32xf32>
    %132 = arith.mulf %123, %129 : vector<2x32xf32>
    %133 = arith.addf %131, %132 : vector<2x32xf32>
    %134 = math.tanh %133 : vector<2x32xf32>
    %135 = arith.mulf %130, %134 : vector<2x32xf32>
    %136 = vector.extract_strided_slice %6 {offsets = [12, 0], sizes = [2, 128], strides = [1, 1]} : vector<16x128xf32> to vector<2x128xf32>
    %cst_34 = arith.constant dense<0.000000e+00> : vector<2x128xf32>
    %137 = tpu.matmul %135, %7, %cst_34 {dimension_numbers = #tpu.dot_dimension_numbers<[1], [0], [0], [1], [0, 0, 1, 1], [], []>} : vector<2x32xf32>, vector<32x128xf32>, vector<2x128xf32> -> vector<2x128xf32>
    %138 = arith.addf %136, %137 : vector<2x128xf32>
    %139 = arith.negf %138 : vector<2x128xf32>
    %140 = math.exp %139 : vector<2x128xf32>
    %cst_35 = arith.constant 1.000000e+00 : f32
    %141 = vector.broadcast %cst_35 : f32 to vector<2x128xf32>
    %142 = arith.addf %141, %140 : vector<2x128xf32>
    %143 = arith.divf %141, %142 : vector<2x128xf32>
    %144 = vector.extract_strided_slice %143 {offsets = [0, 0], sizes = [2, 32], strides = [1, 1]} : vector<2x128xf32> to vector<2x32xf32>
    %145 = vector.extract_strided_slice %143 {offsets = [0, 32], sizes = [2, 32], strides = [1, 1]} : vector<2x128xf32> to vector<2x32xf32>
    %146 = vector.extract_strided_slice %143 {offsets = [0, 64], sizes = [2, 32], strides = [1, 1]} : vector<2x128xf32> to vector<2x32xf32>
    %cst_36 = arith.constant 2.000000e+00 : f32
    %147 = vector.broadcast %cst_36 : f32 to vector<2x32xf32>
    %148 = arith.mulf %147, %146 : vector<2x32xf32>
    %cst_37 = arith.constant 1.000000e+00 : f32
    %149 = vector.broadcast %cst_37 : f32 to vector<2x32xf32>
    %150 = arith.subf %148, %149 : vector<2x32xf32>
    %151 = vector.extract_strided_slice %143 {offsets = [0, 96], sizes = [2, 32], strides = [1, 1]} : vector<2x128xf32> to vector<2x32xf32>
    %152 = arith.mulf %145, %133 : vector<2x32xf32>
    %153 = arith.mulf %144, %150 : vector<2x32xf32>
    %154 = arith.addf %152, %153 : vector<2x32xf32>
    %155 = math.tanh %154 : vector<2x32xf32>
    %156 = arith.mulf %151, %155 : vector<2x32xf32>
    %157 = vector.extract_strided_slice %6 {offsets = [14, 0], sizes = [2, 128], strides = [1, 1]} : vector<16x128xf32> to vector<2x128xf32>
    %cst_38 = arith.constant dense<0.000000e+00> : vector<2x128xf32>
    %158 = tpu.matmul %156, %7, %cst_38 {dimension_numbers = #tpu.dot_dimension_numbers<[1], [0], [0], [1], [0, 0, 1, 1], [], []>} : vector<2x32xf32>, vector<32x128xf32>, vector<2x128xf32> -> vector<2x128xf32>
    %159 = arith.addf %157, %158 : vector<2x128xf32>
    %160 = arith.negf %159 : vector<2x128xf32>
    %161 = math.exp %160 : vector<2x128xf32>
    %cst_39 = arith.constant 1.000000e+00 : f32
    %162 = vector.broadcast %cst_39 : f32 to vector<2x128xf32>
    %163 = arith.addf %162, %161 : vector<2x128xf32>
    %164 = arith.divf %162, %163 : vector<2x128xf32>
    %165 = vector.extract_strided_slice %164 {offsets = [0, 0], sizes = [2, 32], strides = [1, 1]} : vector<2x128xf32> to vector<2x32xf32>
    %166 = vector.extract_strided_slice %164 {offsets = [0, 32], sizes = [2, 32], strides = [1, 1]} : vector<2x128xf32> to vector<2x32xf32>
    %167 = vector.extract_strided_slice %164 {offsets = [0, 64], sizes = [2, 32], strides = [1, 1]} : vector<2x128xf32> to vector<2x32xf32>
    %cst_40 = arith.constant 2.000000e+00 : f32
    %168 = vector.broadcast %cst_40 : f32 to vector<2x32xf32>
    %169 = arith.mulf %168, %167 : vector<2x32xf32>
    %cst_41 = arith.constant 1.000000e+00 : f32
    %170 = vector.broadcast %cst_41 : f32 to vector<2x32xf32>
    %171 = arith.subf %169, %170 : vector<2x32xf32>
    %172 = vector.extract_strided_slice %164 {offsets = [0, 96], sizes = [2, 32], strides = [1, 1]} : vector<2x128xf32> to vector<2x32xf32>
    %173 = arith.mulf %166, %154 : vector<2x32xf32>
    %174 = arith.mulf %165, %171 : vector<2x32xf32>
    %175 = arith.addf %173, %174 : vector<2x32xf32>
    %176 = math.tanh %175 : vector<2x32xf32>
    %177 = arith.mulf %172, %176 : vector<2x32xf32>
    %178 = vector.shape_cast %30 : vector<2x32xf32> to vector<1x2x32xf32>
    %179 = vector.shape_cast %51 : vector<2x32xf32> to vector<1x2x32xf32>
    %180 = vector.shape_cast %72 : vector<2x32xf32> to vector<1x2x32xf32>
    %181 = vector.shape_cast %93 : vector<2x32xf32> to vector<1x2x32xf32>
    %182 = vector.shape_cast %114 : vector<2x32xf32> to vector<1x2x32xf32>
    %183 = vector.shape_cast %135 : vector<2x32xf32> to vector<1x2x32xf32>
    %184 = vector.shape_cast %156 : vector<2x32xf32> to vector<1x2x32xf32>
    %185 = vector.shape_cast %177 : vector<2x32xf32> to vector<1x2x32xf32>
    %186 = tpu.concatenate %178, %179, %180, %181, %182, %183, %184, %185 in 0 : vector<1x2x32xf32>, vector<1x2x32xf32>, vector<1x2x32xf32>, vector<1x2x32xf32>, vector<1x2x32xf32>, vector<1x2x32xf32>, vector<1x2x32xf32>, vector<1x2x32xf32> -> vector<8x2x32xf32>
    %187 = vector.shape_cast %186 : vector<8x2x32xf32> to vector<16x32xf32>
    %c0_42 = arith.constant 0 : index
    %c0_43 = arith.constant 0 : index
    %188 = vector.load %arg5[%c0_42, %c0_43] : memref<32x8xf32, #tpu.memory_space<vmem>>, vector<32x8xf32>
    %cst_44 = arith.constant dense<0.000000e+00> : vector<16x8xf32>
    %189 = tpu.matmul %187, %188, %cst_44 {dimension_numbers = #tpu.dot_dimension_numbers<[1], [0], [0], [1], [0, 0, 1, 1], [], []>} : vector<16x32xf32>, vector<32x8xf32>, vector<16x8xf32> -> vector<16x8xf32>
    %c0_45 = arith.constant 0 : index
    %c0_46 = arith.constant 0 : index
    %190 = vector.load %arg6[%c0_45, %c0_46] : memref<1x8xf32, #tpu.memory_space<vmem>>, vector<1x8xf32>
    %191 = vector.broadcast %190 : vector<1x8xf32> to vector<16x8xf32>
    %192 = arith.addf %189, %191 : vector<16x8xf32>
    %193 = arith.negf %192 : vector<16x8xf32>
    %194 = math.exp %193 : vector<16x8xf32>
    %cst_47 = arith.constant 1.000000e+00 : f32
    %195 = vector.broadcast %cst_47 : f32 to vector<16x8xf32>
    %196 = arith.addf %195, %194 : vector<16x8xf32>
    %197 = arith.divf %195, %196 : vector<16x8xf32>
    %198 = vector.shape_cast %197 : vector<16x8xf32> to vector<8x2x8xf32>
    %c0_48 = arith.constant 0 : index
    %c0_49 = arith.constant 0 : index
    %c0_50 = arith.constant 0 : index
    %199 = vector.load %arg7[%c0_48, %c0_49, %c0_50] : memref<8x2x8xf32, #tpu.memory_space<vmem>>, vector<8x2x8xf32>
    tpu.vector_store %arg7[%c0_48, %c0_49, %c0_50], %198 {strides = array<i32>} : memref<8x2x8xf32, #tpu.memory_space<vmem>>, vector<8x2x8xf32>,
    return
  }
  func.func @transform_0(%arg0: i32) -> (i32, i32, i32) {
    %c0_i32 = arith.constant 0 : i32
    %c0_i32_0 = arith.constant 0 : i32
    %c0_i32_1 = arith.constant 0 : i32
    return %c0_i32, %arg0, %c0_i32_0 : i32, i32, i32
  }
  func.func @transform_1(%arg0: i32) -> (i32, i32) {
    %c0_i32 = arith.constant 0 : i32
    %c0_i32_0 = arith.constant 0 : i32
    %c0_i32_1 = arith.constant 0 : i32
    return %c0_i32, %c0_i32_0 : i32, i32
  }
  func.func @transform_2(%arg0: i32) -> (i32, i32) {
    %c0_i32 = arith.constant 0 : i32
    %c0_i32_0 = arith.constant 0 : i32
    %c0_i32_1 = arith.constant 0 : i32
    return %c0_i32, %c0_i32_0 : i32, i32
  }
  func.func @transform_3(%arg0: i32) -> (i32, i32) {
    %c0_i32 = arith.constant 0 : i32
    %c0_i32_0 = arith.constant 0 : i32
    %c0_i32_1 = arith.constant 0 : i32
    return %c0_i32, %c0_i32_0 : i32, i32
  }
  func.func @transform_4(%arg0: i32) -> (i32, i32) {
    %c0_i32 = arith.constant 0 : i32
    %c0_i32_0 = arith.constant 0 : i32
    %c0_i32_1 = arith.constant 0 : i32
    return %c0_i32, %c0_i32_0 : i32, i32
  }
  func.func @transform_5(%arg0: i32) -> (i32, i32) {
    %c0_i32 = arith.constant 0 : i32
    %c0_i32_0 = arith.constant 0 : i32
    %c0_i32_1 = arith.constant 0 : i32
    return %c0_i32, %c0_i32_0 : i32, i32
  }
  func.func @transform_6(%arg0: i32) -> (i32, i32, i32) {
    %c0_i32 = arith.constant 0 : i32
    %c0_i32_0 = arith.constant 0 : i32
    %c0_i32_1 = arith.constant 0 : i32
    return %c0_i32, %arg0, %c0_i32_0 : i32, i32, i32
  }
}

</mosaic_0001>

<llo_original>
// kernel: tpu_custom_call.1
$region0: #{tpu_custom_call.1}
  #allocation0 [shape = 'u32[]', space=smem, size = 0x4, offset = 0x4, fixed_abs, tag = 'smem constant byte address 0x4 - core index']
  #allocation1 [shape = 'u32[144,128]{1,0:T(1,128)}', space=vmem, size = 0x12000, scoped, tag = 'internal scratch']
  %s0 = inlined_call_operand.vmem [shape: f32[8,2,4], index: 0, kind: input, shape index: {}]
  %s1 = inlined_call_operand.vmem [shape: f32[4,128], index: 1, kind: input, shape index: {}]
  %s2 = inlined_call_operand.vmem [shape: f32[32,128], index: 2, kind: input, shape index: {}]
  %s3 = inlined_call_operand.vmem [shape: f32[1,128], index: 3, kind: input, shape index: {}]
  %s4 = inlined_call_operand.vmem [shape: f32[32,8], index: 4, kind: input, shape index: {}]
  %s5 = inlined_call_operand.vmem [shape: f32[1,8], index: 5, kind: input, shape index: {}]
  %s6 = inlined_call_operand.hbm [shape: f32[8,2,8], index: 6, kind: output, shape index: {}]
  %s7 = sld [smem:[#allocation0]]
  $region34: #{tpu_custom_call.1} parent=0
    _
  %s9 = ssub.s32 1, %s7
  %s10 = scalar_select 0, %s9, %s7
  $region1: #{tpu_custom_call.1} parent=0
    #allocation2 [shape = 'u8[8192]{0}', space=vmem, size = 0x2000, scoped, tag = 'output window, operand 0, single buffered']
    #allocation3 [shape = 's32[1]{0}', space=sflag, size = 0x4, scoped, tag = 'scoped memory for tpu_custom_call.1']
    %11 = vsyncpa [#allocation3], 0
    // Predicated region
    $region2: #{tpu_custom_call.1} parent=1 // pred_check
      _
    $region3: #{tpu_custom_call.1} parent=1 // pred_check_branch
      %13 = sbr.rel (0) target = $region5
    $region4: #{tpu_custom_call.1} parent=1 // pred_region
      _
    $region5: #{tpu_custom_call.1} parent=1 // pred_fallthru
      _
    // Predicated region
    $region6: #{tpu_custom_call.1} parent=1 // pred_check
      _
    $region7: #{tpu_custom_call.1} parent=1 // pred_check_branch
      %15 = sbr.rel (0) target = $region9
    $region8: #{tpu_custom_call.1} parent=1 // pred_region
      _
    $region9: #{tpu_custom_call.1} parent=1 // pred_fallthru
      _
    // Predicated region
    $region10: #{tpu_custom_call.1} parent=1 // pred_check
      _
    $region11: #{tpu_custom_call.1} parent=1 // pred_check_branch
      %17 = sbr.rel (0) target = $region13
    $region12: #{tpu_custom_call.1} parent=1 // pred_region
      _
    $region13: #{tpu_custom_call.1} parent=1 // pred_fallthru
      _
    // Predicated region
    $region14: #{tpu_custom_call.1} parent=1 // pred_check
      _
    $region15: #{tpu_custom_call.1} parent=1 // pred_check_branch
      %19 = sbr.rel (0) target = $region17
    $region16: #{tpu_custom_call.1} parent=1 // pred_region
      _
    $region17: #{tpu_custom_call.1} parent=1 // pred_fallthru
      _
    // Predicated region
    $region18: #{tpu_custom_call.1} parent=1 // pred_check
      _
    $region19: #{tpu_custom_call.1} parent=1 // pred_check_branch
      %21 = sbr.rel (0) target = $region21
    $region20: #{tpu_custom_call.1} parent=1 // pred_region
      _
    $region21: #{tpu_custom_call.1} parent=1 // pred_fallthru
      _
    // Predicated region
    $region22: #{tpu_custom_call.1} parent=1 // pred_check
      _
    $region23: #{tpu_custom_call.1} parent=1 // pred_check_branch
      %23 = sbr.rel (0) target = $region25
    $region24: #{tpu_custom_call.1} parent=1 // pred_region
      _
    $region25: #{tpu_custom_call.1} parent=1 // pred_fallthru
      _
    %v24 = vld [vmem:[%s0] sm:$0x3]
    %v25 = vld [vmem:[%s0 + $0x2] sm:$0x3]
    %v26 = vld [vmem:[%s0 + $0x4] sm:$0x3]
    %v27 = vld [vmem:[%s0 + $0x6] sm:$0x3]
    %v28 = vld [vmem:[%s0 + $0x8] sm:$0x3]
    %v29 = vld [vmem:[%s0 + $0xa] sm:$0x3]
    %v30 = vld [vmem:[%s0 + $0xc] sm:$0x3]
    %v31 = vld [vmem:[%s0 + $0xe] sm:$0x3]
    %v32 = vld [vmem:[%s1] sm:$0xf]
    %v33 = vld [vmem:[%s3] sm:$0x1]
    %v35 = vlaneseq
    %v36 = vshrl.u32 %v35, 7
    %v37 = vsub.s32 0, %v36
    %v38 = vrot.slane %v33, %v37
    %v48 = vcombine.low %v24, %v25
    %v49 = vcombine.low %v26, %v27
    %v51 = vunpack.c.l.s4 1983009808
    %v52 = vunpack.c.0.s8 %v51
    %v53 = vlaneseq
    %v54 = vshrl.u32 %v53, 7
    %v55 = vsub.s32 %v52, %v54
    %v56 = vrot.slane %v48, %v55
    %v58 = vunpack.c.l.s4 1983009808
    %v59 = vunpack.c.0.s8 %v58
    %v60 = vlaneseq
    %v61 = vshrl.u32 %v60, 7
    %v62 = vsub.s32 %v59, %v61
    %v63 = vrot.slane %v49, %v62
    %v64 = vcombine.low %v56, %v63
    %v65 = vcombine.low %v28, %v29
    %v66 = vcombine.low %v30, %v31
    %v68 = vunpack.c.l.s4 1983009808
    %v69 = vunpack.c.0.s8 %v68
    %v70 = vlaneseq
    %v71 = vshrl.u32 %v70, 7
    %v72 = vsub.s32 %v69, %v71
    %v73 = vrot.slane %v65, %v72
    %v75 = vunpack.c.l.s4 1983009808
    %v76 = vunpack.c.0.s8 %v75
    %v77 = vlaneseq
    %v78 = vshrl.u32 %v77, 7
    %v79 = vsub.s32 %v76, %v78
    %v80 = vrot.slane %v66, %v79
    %v81 = vcombine.low %v73, %v80
    %vm82 = vcmask 31744
    %v83 = vsel %vm82, %v64, 0
    %v85 = vsel %vm82, %v81, 0
    %vm87 = vcmask 1043456
    %v89 = vsel %vm87, %v32, 0
    %91 = vmatprep.subr.mxu0 0.0
    %92 = vmatpush1.msra.mxu0 %v89
    %93 = vmatprep.subr.mxu0 0.0
    %94 = vmatpush1.msra.mxu0 0.0
    %95 = vmatprep.subr.mxu0 0.0
    %96 = vmatpush1.msra.mxu0 0.0
    %97 = vmatprep.subr.mxu0 0.0
    %98 = vmatpush1.msra.mxu0 0.0
    %99 = vmatprep.subr.mxu0 0.0
    %100 = vmatpush1.msra.mxu0 0.0
    %101 = vmatprep.subr.mxu0 0.0
    %102 = vmatpush1.msra.mxu0 0.0
    %103 = vmatprep.subr.mxu0 0.0
    %104 = vmatpush1.msra.mxu0 0.0
    %105 = vmatprep.subr.mxu0 0.0
    %106 = vmatpush1.msra.mxu0 0.0
    %107 = vmatprep.subr.mxu0 0.0
    %108 = vmatpush1.msra.mxu0 0.0
    %109 = vmatprep.subr.mxu0 0.0
    %110 = vmatpush1.msra.mxu0 0.0
    %111 = vmatprep.subr.mxu0 0.0
    %112 = vmatpush1.msra.mxu0 0.0
    %113 = vmatprep.subr.mxu0 0.0
    %114 = vmatpush1.msra.mxu0 0.0
    %115 = vmatprep.subr.mxu0 0.0
    %116 = vmatpush1.msra.mxu0 0.0
    %117 = vmatprep.subr.mxu0 0.0
    %118 = vmatpush1.msra.mxu0 0.0
    %119 = vmatprep.subr.mxu0 0.0
    %120 = vmatpush1.msra.mxu0 0.0
    %121 = vmatprep.subr.mxu0 0.0
    %122 = vmatpush1.msra.mxu0 0.0
    %123 = vmatprep.subr.mxu0 0.0
    %124 = vmatpush1.msra.mxu0 0.0
    %125 = vmatprep.subr.mxu0 0.0
    %126 = vmatpush1.msra.mxu0 0.0
    %127 = vmatprep.subr.mxu0 0.0
    %128 = vmatpush1.msra.mxu0 0.0
    %129 = vmatprep.subr.mxu0 0.0
    %130 = vmatpush1.msra.mxu0 0.0
    %131 = vmatprep.subr.mxu0 0.0
    %132 = vmatpush1.msra.mxu0 0.0
    %133 = vmatprep.subr.mxu0 0.0
    %134 = vmatpush1.msra.mxu0 0.0
    %135 = vmatprep.subr.mxu0 0.0
    %136 = vmatpush1.msra.mxu0 0.0
    %137 = vmatprep.subr.mxu0 0.0
    %138 = vmatpush1.msra.mxu0 0.0
    %139 = vmatprep.subr.mxu0 0.0
    %140 = vmatpush1.msra.mxu0 0.0
    %141 = vmatprep.subr.mxu0 0.0
    %142 = vmatpush1.msra.mxu0 0.0
    %143 = vmatprep.subr.mxu0 0.0
    %144 = vmatpush1.msra.mxu0 0.0
    %145 = vmatprep.subr.mxu0 0.0
    %146 = vmatpush1.msra.mxu0 0.0
    %147 = vmatprep.subr.mxu0 0.0
    %148 = vmatpush1.msra.mxu0 0.0
    %149 = vmatprep.subr.mxu0 0.0
    %150 = vmatpush1.msra.mxu0 0.0
    %151 = vmatprep.subr.mxu0 0.0
    %152 = vmatpush1.msra.mxu0 0.0
    %153 = vmatprep.subr.mxu0 0.0
    %154 = vmatpush1.msra.mxu0 0.0
    %155 = vmatprep.mubr.f32.mxu0 0.0
    %156 = vmatmul.mubr.f32.gmra.mrb[0].mxu0 %v83
    %v157 = vpop.f32.mrb[0].mxu0
    %v158 = vadd.f32 %v38, %v157
    %v159 = vpop.f32.mrb[0].mxu0
    %160 = vmatprep.mubr.f32.mxu0 0.0
    %161 = vmatmul.mubr.f32.gmra.mrb[0].mxu0 %v85
    %v162 = vpop.f32.mrb[0].mxu0
    %v163 = vadd.f32 %v38, %v162
    %v164 = vpop.f32.mrb[0].mxu0
    %165 = vdwg.mxu0
    %v166 = vld [vmem:[%s2] sm:$0xff]
    %v167 = vld [vmem:[%s2 + $0x8] sm:$0xff]
    %v168 = vld [vmem:[%s2 + $0x10] sm:$0xff]
    %v169 = vld [vmem:[%s2 + $0x18] sm:$0xff]
    %vm170 = vcmask 261120
    %v172 = vsel %vm170, 0.0, 0
    %174 = vmatprep.subr.mxu0 0.0
    %175 = vmatpush1.msra.mxu0 %v166
    %176 = vmatprep.subr.mxu0 0.0
    %177 = vmatpush1.msra.mxu0 %v167
    %178 = vmatprep.subr.mxu0 0.0
    %179 = vmatpush1.msra.mxu0 %v168
    %180 = vmatprep.subr.mxu0 0.0
    %181 = vmatpush1.msra.mxu0 %v169
    %182 = vmatprep.subr.mxu0 0.0
    %183 = vmatpush1.msra.mxu0 0.0
    %184 = vmatprep.subr.mxu0 0.0
    %185 = vmatpush1.msra.mxu0 0.0
    %186 = vmatprep.subr.mxu0 0.0
    %187 = vmatpush1.msra.mxu0 0.0
    %188 = vmatprep.subr.mxu0 0.0
    %189 = vmatpush1.msra.mxu0 0.0
    %190 = vmatprep.subr.mxu0 0.0
    %191 = vmatpush1.msra.mxu0 0.0
    %192 = vmatprep.subr.mxu0 0.0
    %193 = vmatpush1.msra.mxu0 0.0
    %194 = vmatprep.subr.mxu0 0.0
    %195 = vmatpush1.msra.mxu0 0.0
    %196 = vmatprep.subr.mxu0 0.0
    %197 = vmatpush1.msra.mxu0 0.0
    %198 = vmatprep.subr.mxu0 0.0
    %199 = vmatpush1.msra.mxu0 0.0
    %200 = vmatprep.subr.mxu0 0.0
    %201 = vmatpush1.msra.mxu0 0.0
    %202 = vmatprep.subr.mxu0 0.0
    %203 = vmatpush1.msra.mxu0 0.0
    %204 = vmatprep.subr.mxu0 0.0
    %205 = vmatpush1.msra.mxu0 0.0
    %206 = vmatprep.subr.mxu0 0.0
    %207 = vmatpush1.msra.mxu0 0.0
    %208 = vmatprep.subr.mxu0 0.0
    %209 = vmatpush1.msra.mxu0 0.0
    %210 = vmatprep.subr.mxu0 0.0
    %211 = vmatpush1.msra.mxu0 0.0
    %212 = vmatprep.subr.mxu0 0.0
    %213 = vmatpush1.msra.mxu0 0.0
    %214 = vmatprep.subr.mxu0 0.0
    %215 = vmatpush1.msra.mxu0 0.0
    %216 = vmatprep.subr.mxu0 0.0
    %217 = vmatpush1.msra.mxu0 0.0
    %218 = vmatprep.subr.mxu0 0.0
    %219 = vmatpush1.msra.mxu0 0.0
    %220 = vmatprep.subr.mxu0 0.0
    %221 = vmatpush1.msra.mxu0 0.0
    %222 = vmatprep.subr.mxu0 0.0
    %223 = vmatpush1.msra.mxu0 0.0
    %224 = vmatprep.subr.mxu0 0.0
    %225 = vmatpush1.msra.mxu0 0.0
    %226 = vmatprep.subr.mxu0 0.0
    %227 = vmatpush1.msra.mxu0 0.0
    %228 = vmatprep.subr.mxu0 0.0
    %229 = vmatpush1.msra.mxu0 0.0
    %230 = vmatprep.subr.mxu0 0.0
    %231 = vmatpush1.msra.mxu0 0.0
    %232 = vmatprep.subr.mxu0 0.0
    %233 = vmatpush1.msra.mxu0 0.0
    %234 = vmatprep.subr.mxu0 0.0
    %235 = vmatpush1.msra.mxu0 0.0
    %236 = vmatprep.subr.mxu0 0.0
    %237 = vmatpush1.msra.mxu0 0.0
    %238 = vmatprep.mubr.f32.mxu0 0.0
    %239 = vmatmul.mubr.f32.gmra.mrb[0].mxu0 %v172
    %v240 = vpop.f32.mrb[0].mxu0
    %v241 = vadd.f32 0.0, %v240
    %v242 = vpop.f32.mrb[0].mxu0
    %243 = vdwg.mxu0
    %v244 = vadd.f32 %v158, %v241
    %v245 = vxor.u32 %v244, 2147483648
    %v246 = vmul.f32 %v245, 1.442695
    %v247 = vpow.pop %v246
    %v248 = vadd.f32 %v247, 1.0
    %v249 = vrcp.pop %v248
    %v250 = vmul.f32 1.0, %v249
    %v251 = vmul.f32 %v250, 2.0
    %v252 = vsub.f32 %v251, 1.0
    %v253 = vmul.f32 %v250, 0.0
    %255 = vrot.lane.b32.xlu0 %v252, 64
    %v256 = vpop.permute.xlu0 %255
    %v258 = vmul.f32 %v250, %v256
    %260 = vrot.lane.b32.xlu0 %v258, 32
    %v261 = vpop.permute.xlu0 %260
    %v263 = vadd.f32 %v253, %v261
    %v264 = vtanh.pop %v263
    %266 = vrot.lane.b32.xlu0 %v264, 64
    %v267 = vpop.permute.xlu0 %266
    %v269 = vmul.f32 %v250, %v267
    %271 = vrot.lane.b32.xlu0 %v269, 32
    %v272 = vpop.permute.xlu0 %271
    %v273 = vsel %vm170, %v272, 0
    %275 = vmatprep.subr.mxu0 0.0
    %276 = vmatpush1.msra.mxu0 %v166
    %277 = vmatprep.subr.mxu0 0.0
    %278 = vmatpush1.msra.mxu0 %v167
    %279 = vmatprep.subr.mxu0 0.0
    %280 = vmatpush1.msra.mxu0 %v168
    %281 = vmatprep.subr.mxu0 0.0
    %282 = vmatpush1.msra.mxu0 %v169
    %283 = vmatprep.subr.mxu0 0.0
    %284 = vmatpush1.msra.mxu0 0.0
    %285 = vmatprep.subr.mxu0 0.0
    %286 = vmatpush1.msra.mxu0 0.0
    %287 = vmatprep.subr.mxu0 0.0
    %288 = vmatpush1.msra.mxu0 0.0
    %289 = vmatprep.subr.mxu0 0.0
    %290 = vmatpush1.msra.mxu0 0.0
    %291 = vmatprep.subr.mxu0 0.0
    %292 = vmatpush1.msra.mxu0 0.0
    %293 = vmatprep.subr.mxu0 0.0
    %294 = vmatpush1.msra.mxu0 0.0
    %295 = vmatprep.subr.mxu0 0.0
    %296 = vmatpush1.msra.mxu0 0.0
    %297 = vmatprep.subr.mxu0 0.0
    %298 = vmatpush1.msra.mxu0 0.0
    %299 = vmatprep.subr.mxu0 0.0
    %300 = vmatpush1.msra.mxu0 0.0
    %301 = vmatprep.subr.mxu0 0.0
    %302 = vmatpush1.msra.mxu0 0.0
    %303 = vmatprep.subr.mxu0 0.0
    %304 = vmatpush1.msra.mxu0 0.0
    %305 = vmatprep.subr.mxu0 0.0
    %306 = vmatpush1.msra.mxu0 0.0
    %307 = vmatprep.subr.mxu0 0.0
    %308 = vmatpush1.msra.mxu0 0.0
    %309 = vmatprep.subr.mxu0 0.0
    %310 = vmatpush1.msra.mxu0 0.0
    %311 = vmatprep.subr.mxu0 0.0
    %312 = vmatpush1.msra.mxu0 0.0
    %313 = vmatprep.subr.mxu0 0.0
    %314 = vmatpush1.msra.mxu0 0.0
    %315 = vmatprep.subr.mxu0 0.0
    %316 = vmatpush1.msra.mxu0 0.0
    %317 = vmatprep.subr.mxu0 0.0
    %318 = vmatpush1.msra.mxu0 0.0
    %319 = vmatprep.subr.mxu0 0.0
    %320 = vmatpush1.msra.mxu0 0.0
    %321 = vmatprep.subr.mxu0 0.0
    %322 = vmatpush1.msra.mxu0 0.0
    %323 = vmatprep.subr.mxu0 0.0
    %324 = vmatpush1.msra.mxu0 0.0
    %325 = vmatprep.subr.mxu0 0.0
    %326 = vmatpush1.msra.mxu0 0.0
    %327 = vmatprep.subr.mxu0 0.0
    %328 = vmatpush1.msra.mxu0 0.0
    %329 = vmatprep.subr.mxu0 0.0
    %330 = vmatpush1.msra.mxu0 0.0
    %331 = vmatprep.subr.mxu0 0.0
    %332 = vmatpush1.msra.mxu0 0.0
    %333 = vmatprep.subr.mxu0 0.0
    %334 = vmatpush1.msra.mxu0 0.0
    %335 = vmatprep.subr.mxu0 0.0
    %336 = vmatpush1.msra.mxu0 0.0
    %337 = vmatprep.subr.mxu0 0.0
    %338 = vmatpush1.msra.mxu0 0.0
    %339 = vmatprep.mubr.f32.mxu0 0.0
    %340 = vmatmul.mubr.f32.gmra.mrb[0].mxu0 %v273
    %v341 = vpop.f32.mrb[0].mxu0
    %v342 = vadd.f32 0.0, %v341
    %v343 = vpop.f32.mrb[0].mxu0
    %344 = vdwg.mxu0
    %v346 = vrot.slane %v342, 6
    %v348 = vadd.f32 %v158, %v346
    %v349 = vxor.u32 %v348, 2147483648
    %v350 = vmul.f32 %v349, 1.442695
    %v351 = vpow.pop %v350
    %v352 = vadd.f32 %v351, 1.0
    %v353 = vrcp.pop %v352
    %v354 = vmul.f32 1.0, %v353
    %v355 = vmul.f32 %v354, 2.0
    %v356 = vsub.f32 %v355, 1.0
    %v358 = vrot.slane %v263, 6
    %v360 = vmul.f32 %v354, %v358
    %362 = vrot.lane.b32.xlu0 %v356, 64
    %v363 = vpop.permute.xlu0 %362
    %v365 = vmul.f32 %v354, %v363
    %367 = vrot.lane.b32.xlu0 %v365, 32
    %v368 = vpop.permute.xlu0 %367
    %v370 = vadd.f32 %v360, %v368
    %v371 = vtanh.pop %v370
    %373 = vrot.lane.b32.xlu0 %v371, 64
    %v374 = vpop.permute.xlu0 %373
    %v376 = vmul.f32 %v354, %v374
    %v378 = vrot.slane %v376, 2
    %379 = vrot.lane.b32.xlu0 %v378, 32
    %v380 = vpop.permute.xlu0 %379
    %v381 = vsel %vm170, %v380, 0
    %383 = vmatprep.subr.mxu0 0.0
    %384 = vmatpush1.msra.mxu0 %v166
    %385 = vmatprep.subr.mxu0 0.0
    %386 = vmatpush1.msra.mxu0 %v167
    %387 = vmatprep.subr.mxu0 0.0
    %388 = vmatpush1.msra.mxu0 %v168
    %389 = vmatprep.subr.mxu0 0.0
    %390 = vmatpush1.msra.mxu0 %v169
    %391 = vmatprep.subr.mxu0 0.0
    %392 = vmatpush1.msra.mxu0 0.0
    %393 = vmatprep.subr.mxu0 0.0
    %394 = vmatpush1.msra.mxu0 0.0
    %395 = vmatprep.subr.mxu0 0.0
    %396 = vmatpush1.msra.mxu0 0.0
    %397 = vmatprep.subr.mxu0 0.0
    %398 = vmatpush1.msra.mxu0 0.0
    %399 = vmatprep.subr.mxu0 0.0
    %400 = vmatpush1.msra.mxu0 0.0
    %401 = vmatprep.subr.mxu0 0.0
    %402 = vmatpush1.msra.mxu0 0.0
    %403 = vmatprep.subr.mxu0 0.0
    %404 = vmatpush1.msra.mxu0 0.0
    %405 = vmatprep.subr.mxu0 0.0
    %406 = vmatpush1.msra.mxu0 0.0
    %407 = vmatprep.subr.mxu0 0.0
    %408 = vmatpush1.msra.mxu0 0.0
    %409 = vmatprep.subr.mxu0 0.0
    %410 = vmatpush1.msra.mxu0 0.0
    %411 = vmatprep.subr.mxu0 0.0
    %412 = vmatpush1.msra.mxu0 0.0
    %413 = vmatprep.subr.mxu0 0.0
    %414 = vmatpush1.msra.mxu0 0.0
    %415 = vmatprep.subr.mxu0 0.0
    %416 = vmatpush1.msra.mxu0 0.0
    %417 = vmatprep.subr.mxu0 0.0
    %418 = vmatpush1.msra.mxu0 0.0
    %419 = vmatprep.subr.mxu0 0.0
    %420 = vmatpush1.msra.mxu0 0.0
    %421 = vmatprep.subr.mxu0 0.0
    %422 = vmatpush1.msra.mxu0 0.0
    %423 = vmatprep.subr.mxu0 0.0
    %424 = vmatpush1.msra.mxu0 0.0
    %425 = vmatprep.subr.mxu0 0.0
    %426 = vmatpush1.msra.mxu0 0.0
    %427 = vmatprep.subr.mxu0 0.0
    %428 = vmatpush1.msra.mxu0 0.0
    %429 = vmatprep.subr.mxu0 0.0
    %430 = vmatpush1.msra.mxu0 0.0
    %431 = vmatprep.subr.mxu0 0.0
    %432 = vmatpush1.msra.mxu0 0.0
    %433 = vmatprep.subr.mxu0 0.0
    %434 = vmatpush1.msra.mxu0 0.0
    %435 = vmatprep.subr.mxu0 0.0
    %436 = vmatpush1.msra.mxu0 0.0
    %437 = vmatprep.subr.mxu0 0.0
    %438 = vmatpush1.msra.mxu0 0.0
    %439 = vmatprep.subr.mxu0 0.0
    %440 = vmatpush1.msra.mxu0 0.0
    %441 = vmatprep.subr.mxu0 0.0
    %442 = vmatpush1.msra.mxu0 0.0
    %443 = vmatprep.subr.mxu0 0.0
    %444 = vmatpush1.msra.mxu0 0.0
    %445 = vmatprep.subr.mxu0 0.0
    %446 = vmatpush1.msra.mxu0 0.0
    %447 = vmatprep.mubr.f32.mxu0 0.0
    %448 = vmatmul.mubr.f32.gmra.mrb[0].mxu0 %v381
    %v449 = vpop.f32.mrb[0].mxu0
    %v450 = vadd.f32 0.0, %v449
    %v451 = vpop.f32.mrb[0].mxu0
    %452 = vdwg.mxu0
    %v454 = vrot.slane %v450, 4
    %v456 = vadd.f32 %v158, %v454
    %v457 = vxor.u32 %v456, 2147483648
    %v458 = vmul.f32 %v457, 1.442695
    %v459 = vpow.pop %v458
    %v460 = vadd.f32 %v459, 1.0
    %v461 = vrcp.pop %v460
    %v462 = vmul.f32 1.0, %v461
    %v463 = vmul.f32 %v462, 2.0
    %v464 = vsub.f32 %v463, 1.0
    %v466 = vrot.slane %v370, 6
    %v468 = vmul.f32 %v462, %v466
    %470 = vrot.lane.b32.xlu0 %v464, 64
    %v471 = vpop.permute.xlu0 %470
    %v473 = vmul.f32 %v462, %v471
    %475 = vrot.lane.b32.xlu0 %v473, 32
    %v476 = vpop.permute.xlu0 %475
    %v478 = vadd.f32 %v468, %v476
    %v479 = vtanh.pop %v478
    %481 = vrot.lane.b32.xlu0 %v479, 64
    %v482 = vpop.permute.xlu0 %481
    %v484 = vmul.f32 %v462, %v482
    %v486 = vrot.slane %v484, 4
    %487 = vrot.lane.b32.xlu0 %v486, 32
    %v488 = vpop.permute.xlu0 %487
    %v489 = vsel %vm170, %v488, 0
    %491 = vmatprep.subr.mxu0 0.0
    %492 = vmatpush1.msra.mxu0 %v166
    %493 = vmatprep.subr.mxu0 0.0
    %494 = vmatpush1.msra.mxu0 %v167
    %495 = vmatprep.subr.mxu0 0.0
    %496 = vmatpush1.msra.mxu0 %v168
    %497 = vmatprep.subr.mxu0 0.0
    %498 = vmatpush1.msra.mxu0 %v169
    %499 = vmatprep.subr.mxu0 0.0
    %500 = vmatpush1.msra.mxu0 0.0
    %501 = vmatprep.subr.mxu0 0.0
    %502 = vmatpush1.msra.mxu0 0.0
    %503 = vmatprep.subr.mxu0 0.0
    %504 = vmatpush1.msra.mxu0 0.0
    %505 = vmatprep.subr.mxu0 0.0
    %506 = vmatpush1.msra.mxu0 0.0
    %507 = vmatprep.subr.mxu0 0.0
    %508 = vmatpush1.msra.mxu0 0.0
    %509 = vmatprep.subr.mxu0 0.0
    %510 = vmatpush1.msra.mxu0 0.0
    %511 = vmatprep.subr.mxu0 0.0
    %512 = vmatpush1.msra.mxu0 0.0
    %513 = vmatprep.subr.mxu0 0.0
    %514 = vmatpush1.msra.mxu0 0.0
    %515 = vmatprep.subr.mxu0 0.0
    %516 = vmatpush1.msra.mxu0 0.0
    %517 = vmatprep.subr.mxu0 0.0
    %518 = vmatpush1.msra.mxu0 0.0
    %519 = vmatprep.subr.mxu0 0.0
    %520 = vmatpush1.msra.mxu0 0.0
    %521 = vmatprep.subr.mxu0 0.0
    %522 = vmatpush1.msra.mxu0 0.0
    %523 = vmatprep.subr.mxu0 0.0
    %524 = vmatpush1.msra.mxu0 0.0
    %525 = vmatprep.subr.mxu0 0.0
    %526 = vmatpush1.msra.mxu0 0.0
    %527 = vmatprep.subr.mxu0 0.0
    %528 = vmatpush1.msra.mxu0 0.0
    %529 = vmatprep.subr.mxu0 0.0
    %530 = vmatpush1.msra.mxu0 0.0
    %531 = vmatprep.subr.mxu0 0.0
    %532 = vmatpush1.msra.mxu0 0.0
    %533 = vmatprep.subr.mxu0 0.0
    %534 = vmatpush1.msra.mxu0 0.0
    %535 = vmatprep.subr.mxu0 0.0
    %536 = vmatpush1.msra.mxu0 0.0
    %537 = vmatprep.subr.mxu0 0.0
    %538 = vmatpush1.msra.mxu0 0.0
    %539 = vmatprep.subr.mxu0 0.0
    %540 = vmatpush1.msra.mxu0 0.0
    %541 = vmatprep.subr.mxu0 0.0
    %542 = vmatpush1.msra.mxu0 0.0
    %543 = vmatprep.subr.mxu0 0.0
    %544 = vmatpush1.msra.mxu0 0.0
    %545 = vmatprep.subr.mxu0 0.0
    %546 = vmatpush1.msra.mxu0 0.0
    %547 = vmatprep.subr.mxu0 0.0
    %548 = vmatpush1.msra.mxu0 0.0
    %549 = vmatprep.subr.mxu0 0.0
    %550 = vmatpush1.msra.mxu0 0.0
    %551 = vmatprep.subr.mxu0 0.0
    %552 = vmatpush1.msra.mxu0 0.0
    %553 = vmatprep.subr.mxu0 0.0
    %554 = vmatpush1.msra.mxu0 0.0
    %555 = vmatprep.mubr.f32.mxu0 0.0
    %556 = vmatmul.mubr.f32.gmra.mrb[0].mxu0 %v489
    %v557 = vpop.f32.mrb[0].mxu0
    %v558 = vadd.f32 0.0, %v557
    %v559 = vpop.f32.mrb[0].mxu0
    %560 = vdwg.mxu0
    %v562 = vrot.slane %v558, 2
    %v564 = vadd.f32 %v158, %v562
    %v565 = vxor.u32 %v564, 2147483648
    %v566 = vmul.f32 %v565, 1.442695
    %v567 = vpow.pop %v566
    %v568 = vadd.f32 %v567, 1.0
    %v569 = vrcp.pop %v568
    %v570 = vmul.f32 1.0, %v569
    %v571 = vmul.f32 %v570, 2.0
    %v572 = vsub.f32 %v571, 1.0
    %v574 = vrot.slane %v478, 6
    %v576 = vmul.f32 %v570, %v574
    %578 = vrot.lane.b32.xlu0 %v572, 64
    %v579 = vpop.permute.xlu0 %578
    %v581 = vmul.f32 %v570, %v579
    %583 = vrot.lane.b32.xlu0 %v581, 32
    %v584 = vpop.permute.xlu0 %583
    %v586 = vadd.f32 %v576, %v584
    %v587 = vtanh.pop %v586
    %589 = vrot.lane.b32.xlu0 %v587, 64
    %v590 = vpop.permute.xlu0 %589
    %v592 = vmul.f32 %v570, %v590
    %v594 = vrot.slane %v592, 6
    %595 = vrot.lane.b32.xlu0 %v594, 32
    %v596 = vpop.permute.xlu0 %595
    %v597 = vsel %vm170, %v596, 0
    %599 = vmatprep.subr.mxu0 0.0
    %600 = vmatpush1.msra.mxu0 %v166
    %601 = vmatprep.subr.mxu0 0.0
    %602 = vmatpush1.msra.mxu0 %v167
    %603 = vmatprep.subr.mxu0 0.0
    %604 = vmatpush1.msra.mxu0 %v168
    %605 = vmatprep.subr.mxu0 0.0
    %606 = vmatpush1.msra.mxu0 %v169
    %607 = vmatprep.subr.mxu0 0.0
    %608 = vmatpush1.msra.mxu0 0.0
    %609 = vmatprep.subr.mxu0 0.0
    %610 = vmatpush1.msra.mxu0 0.0
    %611 = vmatprep.subr.mxu0 0.0
    %612 = vmatpush1.msra.mxu0 0.0
    %613 = vmatprep.subr.mxu0 0.0
    %614 = vmatpush1.msra.mxu0 0.0
    %615 = vmatprep.subr.mxu0 0.0
    %616 = vmatpush1.msra.mxu0 0.0
    %617 = vmatprep.subr.mxu0 0.0
    %618 = vmatpush1.msra.mxu0 0.0
    %619 = vmatprep.subr.mxu0 0.0
    %620 = vmatpush1.msra.mxu0 0.0
    %621 = vmatprep.subr.mxu0 0.0
    %622 = vmatpush1.msra.mxu0 0.0
    %623 = vmatprep.subr.mxu0 0.0
    %624 = vmatpush1.msra.mxu0 0.0
    %625 = vmatprep.subr.mxu0 0.0
    %626 = vmatpush1.msra.mxu0 0.0
    %627 = vmatprep.subr.mxu0 0.0
    %628 = vmatpush1.msra.mxu0 0.0
    %629 = vmatprep.subr.mxu0 0.0
    %630 = vmatpush1.msra.mxu0 0.0
    %631 = vmatprep.subr.mxu0 0.0
    %632 = vmatpush1.msra.mxu0 0.0
    %633 = vmatprep.subr.mxu0 0.0
    %634 = vmatpush1.msra.mxu0 0.0
    %635 = vmatprep.subr.mxu0 0.0
    %636 = vmatpush1.msra.mxu0 0.0
    %637 = vmatprep.subr.mxu0 0.0
    %638 = vmatpush1.msra.mxu0 0.0
    %639 = vmatprep.subr.mxu0 0.0
    %640 = vmatpush1.msra.mxu0 0.0
    %641 = vmatprep.subr.mxu0 0.0
    %642 = vmatpush1.msra.mxu0 0.0
    %643 = vmatprep.subr.mxu0 0.0
    %644 = vmatpush1.msra.mxu0 0.0
    %645 = vmatprep.subr.mxu0 0.0
    %646 = vmatpush1.msra.mxu0 0.0
    %647 = vmatprep.subr.mxu0 0.0
    %648 = vmatpush1.msra.mxu0 0.0
    %649 = vmatprep.subr.mxu0 0.0
    %650 = vmatpush1.msra.mxu0 0.0
    %651 = vmatprep.subr.mxu0 0.0
    %652 = vmatpush1.msra.mxu0 0.0
    %653 = vmatprep.subr.mxu0 0.0
    %654 = vmatpush1.msra.mxu0 0.0
    %655 = vmatprep.subr.mxu0 0.0
    %656 = vmatpush1.msra.mxu0 0.0
    %657 = vmatprep.subr.mxu0 0.0
    %658 = vmatpush1.msra.mxu0 0.0
    %659 = vmatprep.subr.mxu0 0.0
    %660 = vmatpush1.msra.mxu0 0.0
    %661 = vmatprep.subr.mxu0 0.0
    %662 = vmatpush1.msra.mxu0 0.0
    %663 = vmatprep.mubr.f32.mxu0 0.0
    %664 = vmatmul.mubr.f32.gmra.mrb[0].mxu0 %v597
    %v665 = vpop.f32.mrb[0].mxu0
    %v666 = vadd.f32 0.0, %v665
    %v667 = vpop.f32.mrb[0].mxu0
    %668 = vdwg.mxu0
    %v669 = vadd.f32 %v163, %v666
    %v670 = vxor.u32 %v669, 2147483648
    %v671 = vmul.f32 %v670, 1.442695
    %v672 = vpow.pop %v671
    %v673 = vadd.f32 %v672, 1.0
    %v674 = vrcp.pop %v673
    %v675 = vmul.f32 1.0, %v674
    %v676 = vmul.f32 %v675, 2.0
    %v677 = vsub.f32 %v676, 1.0
    %v679 = vrot.slane %v586, 6
    %v681 = vmul.f32 %v675, %v679
    %683 = vrot.lane.b32.xlu0 %v677, 64
    %v684 = vpop.permute.xlu0 %683
    %v686 = vmul.f32 %v675, %v684
    %688 = vrot.lane.b32.xlu0 %v686, 32
    %v689 = vpop.permute.xlu0 %688
    %v691 = vadd.f32 %v681, %v689
    %v692 = vtanh.pop %v691
    %694 = vrot.lane.b32.xlu0 %v692, 64
    %v695 = vpop.permute.xlu0 %694
    %v697 = vmul.f32 %v675, %v695
    %699 = vrot.lane.b32.xlu0 %v697, 32
    %v700 = vpop.permute.xlu0 %699
    %v701 = vsel %vm170, %v700, 0
    %703 = vmatprep.subr.mxu0 0.0
    %704 = vmatpush1.msra.mxu0 %v166
    %705 = vmatprep.subr.mxu0 0.0
    %706 = vmatpush1.msra.mxu0 %v167
    %707 = vmatprep.subr.mxu0 0.0
    %708 = vmatpush1.msra.mxu0 %v168
    %709 = vmatprep.subr.mxu0 0.0
    %710 = vmatpush1.msra.mxu0 %v169
    %711 = vmatprep.subr.mxu0 0.0
    %712 = vmatpush1.msra.mxu0 0.0
    %713 = vmatprep.subr.mxu0 0.0
    %714 = vmatpush1.msra.mxu0 0.0
    %715 = vmatprep.subr.mxu0 0.0
    %716 = vmatpush1.msra.mxu0 0.0
    %717 = vmatprep.subr.mxu0 0.0
    %718 = vmatpush1.msra.mxu0 0.0
    %719 = vmatprep.subr.mxu0 0.0
    %720 = vmatpush1.msra.mxu0 0.0
    %721 = vmatprep.subr.mxu0 0.0
    %722 = vmatpush1.msra.mxu0 0.0
    %723 = vmatprep.subr.mxu0 0.0
    %724 = vmatpush1.msra.mxu0 0.0
    %725 = vmatprep.subr.mxu0 0.0
    %726 = vmatpush1.msra.mxu0 0.0
    %727 = vmatprep.subr.mxu0 0.0
    %728 = vmatpush1.msra.mxu0 0.0
    %729 = vmatprep.subr.mxu0 0.0
    %730 = vmatpush1.msra.mxu0 0.0
    %731 = vmatprep.subr.mxu0 0.0
    %732 = vmatpush1.msra.mxu0 0.0
    %733 = vmatprep.subr.mxu0 0.0
    %734 = vmatpush1.msra.mxu0 0.0
    %735 = vmatprep.subr.mxu0 0.0
    %736 = vmatpush1.msra.mxu0 0.0
    %737 = vmatprep.subr.mxu0 0.0
    %738 = vmatpush1.msra.mxu0 0.0
    %739 = vmatprep.subr.mxu0 0.0
    %740 = vmatpush1.msra.mxu0 0.0
    %741 = vmatprep.subr.mxu0 0.0
    %742 = vmatpush1.msra.mxu0 0.0
    %743 = vmatprep.subr.mxu0 0.0
    %744 = vmatpush1.msra.mxu0 0.0
    %745 = vmatprep.subr.mxu0 0.0
    %746 = vmatpush1.msra.mxu0 0.0
    %747 = vmatprep.subr.mxu0 0.0
    %748 = vmatpush1.msra.mxu0 0.0
    %749 = vmatprep.subr.mxu0 0.0
    %750 = vmatpush1.msra.mxu0 0.0
    %751 = vmatprep.subr.mxu0 0.0
    %752 = vmatpush1.msra.mxu0 0.0
    %753 = vmatprep.subr.mxu0 0.0
    %754 = vmatpush1.msra.mxu0 0.0
    %755 = vmatprep.subr.mxu0 0.0
    %756 = vmatpush1.msra.mxu0 0.0
    %757 = vmatprep.subr.mxu0 0.0
    %758 = vmatpush1.msra.mxu0 0.0
    %759 = vmatprep.subr.mxu0 0.0
    %760 = vmatpush1.msra.mxu0 0.0
    %761 = vmatprep.subr.mxu0 0.0
    %762 = vmatpush1.msra.mxu0 0.0
    %763 = vmatprep.subr.mxu0 0.0
    %764 = vmatpush1.msra.mxu0 0.0
    %765 = vmatprep.subr.mxu0 0.0
    %766 = vmatpush1.msra.mxu0 0.0
    %767 = vmatprep.mubr.f32.mxu0 0.0
    %768 = vmatmul.mubr.f32.gmra.mrb[0].mxu0 %v701
    %v769 = vpop.f32.mrb[0].mxu0
    %v770 = vadd.f32 0.0, %v769
    %v771 = vpop.f32.mrb[0].mxu0
    %772 = vdwg.mxu0
    %v774 = vrot.slane %v770, 6
    %v776 = vadd.f32 %v163, %v774
    %v777 = vxor.u32 %v776, 2147483648
    %v778 = vmul.f32 %v777, 1.442695
    %v779 = vpow.pop %v778
    %v780 = vadd.f32 %v779, 1.0
    %v781 = vrcp.pop %v780
    %v782 = vmul.f32 1.0, %v781
    %v783 = vmul.f32 %v782, 2.0
    %v784 = vsub.f32 %v783, 1.0
    %v786 = vrot.slane %v691, 6
    %v788 = vmul.f32 %v782, %v786
    %790 = vrot.lane.b32.xlu0 %v784, 64
    %v791 = vpop.permute.xlu0 %790
    %v793 = vmul.f32 %v782, %v791
    %795 = vrot.lane.b32.xlu0 %v793, 32
    %v796 = vpop.permute.xlu0 %795
    %v798 = vadd.f32 %v788, %v796
    %v799 = vtanh.pop %v798
    %801 = vrot.lane.b32.xlu0 %v799, 64
    %v802 = vpop.permute.xlu0 %801
    %v804 = vmul.f32 %v782, %v802
    %v806 = vrot.slane %v804, 2
    %807 = vrot.lane.b32.xlu0 %v806, 32
    %v808 = vpop.permute.xlu0 %807
    %v809 = vsel %vm170, %v808, 0
    %811 = vmatprep.subr.mxu0 0.0
    %812 = vmatpush1.msra.mxu0 %v166
    %813 = vmatprep.subr.mxu0 0.0
    %814 = vmatpush1.msra.mxu0 %v167
    %815 = vmatprep.subr.mxu0 0.0
    %816 = vmatpush1.msra.mxu0 %v168
    %817 = vmatprep.subr.mxu0 0.0
    %818 = vmatpush1.msra.mxu0 %v169
    %819 = vmatprep.subr.mxu0 0.0
    %820 = vmatpush1.msra.mxu0 0.0
    %821 = vmatprep.subr.mxu0 0.0
    %822 = vmatpush1.msra.mxu0 0.0
    %823 = vmatprep.subr.mxu0 0.0
    %824 = vmatpush1.msra.mxu0 0.0
    %825 = vmatprep.subr.mxu0 0.0
    %826 = vmatpush1.msra.mxu0 0.0
    %827 = vmatprep.subr.mxu0 0.0
    %828 = vmatpush1.msra.mxu0 0.0
    %829 = vmatprep.subr.mxu0 0.0
    %830 = vmatpush1.msra.mxu0 0.0
    %831 = vmatprep.subr.mxu0 0.0
    %832 = vmatpush1.msra.mxu0 0.0
    %833 = vmatprep.subr.mxu0 0.0
    %834 = vmatpush1.msra.mxu0 0.0
    %835 = vmatprep.subr.mxu0 0.0
    %836 = vmatpush1.msra.mxu0 0.0
    %837 = vmatprep.subr.mxu0 0.0
    %838 = vmatpush1.msra.mxu0 0.0
    %839 = vmatprep.subr.mxu0 0.0
    %840 = vmatpush1.msra.mxu0 0.0
    %841 = vmatprep.subr.mxu0 0.0
    %842 = vmatpush1.msra.mxu0 0.0
    %843 = vmatprep.subr.mxu0 0.0
    %844 = vmatpush1.msra.mxu0 0.0
    %845 = vmatprep.subr.mxu0 0.0
    %846 = vmatpush1.msra.mxu0 0.0
    %847 = vmatprep.subr.mxu0 0.0
    %848 = vmatpush1.msra.mxu0 0.0
    %849 = vmatprep.subr.mxu0 0.0
    %850 = vmatpush1.msra.mxu0 0.0
    %851 = vmatprep.subr.mxu0 0.0
    %852 = vmatpush1.msra.mxu0 0.0
    %853 = vmatprep.subr.mxu0 0.0
    %854 = vmatpush1.msra.mxu0 0.0
    %855 = vmatprep.subr.mxu0 0.0
    %856 = vmatpush1.msra.mxu0 0.0
    %857 = vmatprep.subr.mxu0 0.0
    %858 = vmatpush1.msra.mxu0 0.0
    %859 = vmatprep.subr.mxu0 0.0
    %860 = vmatpush1.msra.mxu0 0.0
    %861 = vmatprep.subr.mxu0 0.0
    %862 = vmatpush1.msra.mxu0 0.0
    %863 = vmatprep.subr.mxu0 0.0
    %864 = vmatpush1.msra.mxu0 0.0
    %865 = vmatprep.subr.mxu0 0.0
    %866 = vmatpush1.msra.mxu0 0.0
    %867 = vmatprep.subr.mxu0 0.0
    %868 = vmatpush1.msra.mxu0 0.0
    %869 = vmatprep.subr.mxu0 0.0
    %870 = vmatpush1.msra.mxu0 0.0
    %871 = vmatprep.subr.mxu0 0.0
    %872 = vmatpush1.msra.mxu0 0.0
    %873 = vmatprep.subr.mxu0 0.0
    %874 = vmatpush1.msra.mxu0 0.0
    %875 = vmatprep.mubr.f32.mxu0 0.0
    %876 = vmatmul.mubr.f32.gmra.mrb[0].mxu0 %v809
    %v877 = vpop.f32.mrb[0].mxu0
    %v878 = vadd.f32 0.0, %v877
    %v879 = vpop.f32.mrb[0].mxu0
    %880 = vdwg.mxu0
    %v882 = vrot.slane %v878, 4
    %v884 = vadd.f32 %v163, %v882
    %v885 = vxor.u32 %v884, 2147483648
    %v886 = vmul.f32 %v885, 1.442695
    %v887 = vpow.pop %v886
    %v888 = vadd.f32 %v887, 1.0
    %v889 = vrcp.pop %v888
    %v890 = vmul.f32 1.0, %v889
    %v891 = vmul.f32 %v890, 2.0
    %v892 = vsub.f32 %v891, 1.0
    %v894 = vrot.slane %v798, 6
    %v896 = vmul.f32 %v890, %v894
    %898 = vrot.lane.b32.xlu0 %v892, 64
    %v899 = vpop.permute.xlu0 %898
    %v901 = vmul.f32 %v890, %v899
    %903 = vrot.lane.b32.xlu0 %v901, 32
    %v904 = vpop.permute.xlu0 %903
    %v906 = vadd.f32 %v896, %v904
    %v907 = vtanh.pop %v906
    %909 = vrot.lane.b32.xlu0 %v907, 64
    %v910 = vpop.permute.xlu0 %909
    %v912 = vmul.f32 %v890, %v910
    %v914 = vrot.slane %v912, 4
    %915 = vrot.lane.b32.xlu0 %v914, 32
    %v916 = vpop.permute.xlu0 %915
    %v917 = vsel %vm170, %v916, 0
    %919 = vmatprep.subr.mxu0 0.0
    %920 = vmatpush1.msra.mxu0 %v166
    %921 = vmatprep.subr.mxu0 0.0
    %922 = vmatpush1.msra.mxu0 %v167
    %923 = vmatprep.subr.mxu0 0.0
    %924 = vmatpush1.msra.mxu0 %v168
    %925 = vmatprep.subr.mxu0 0.0
    %926 = vmatpush1.msra.mxu0 %v169
    %927 = vmatprep.subr.mxu0 0.0
    %928 = vmatpush1.msra.mxu0 0.0
    %929 = vmatprep.subr.mxu0 0.0
    %930 = vmatpush1.msra.mxu0 0.0
    %931 = vmatprep.subr.mxu0 0.0
    %932 = vmatpush1.msra.mxu0 0.0
    %933 = vmatprep.subr.mxu0 0.0
    %934 = vmatpush1.msra.mxu0 0.0
    %935 = vmatprep.subr.mxu0 0.0
    %936 = vmatpush1.msra.mxu0 0.0
    %937 = vmatprep.subr.mxu0 0.0
    %938 = vmatpush1.msra.mxu0 0.0
    %939 = vmatprep.subr.mxu0 0.0
    %940 = vmatpush1.msra.mxu0 0.0
    %941 = vmatprep.subr.mxu0 0.0
    %942 = vmatpush1.msra.mxu0 0.0
    %943 = vmatprep.subr.mxu0 0.0
    %944 = vmatpush1.msra.mxu0 0.0
    %945 = vmatprep.subr.mxu0 0.0
    %946 = vmatpush1.msra.mxu0 0.0
    %947 = vmatprep.subr.mxu0 0.0
    %948 = vmatpush1.msra.mxu0 0.0
    %949 = vmatprep.subr.mxu0 0.0
    %950 = vmatpush1.msra.mxu0 0.0
    %951 = vmatprep.subr.mxu0 0.0
    %952 = vmatpush1.msra.mxu0 0.0
    %953 = vmatprep.subr.mxu0 0.0
    %954 = vmatpush1.msra.mxu0 0.0
    %955 = vmatprep.subr.mxu0 0.0
    %956 = vmatpush1.msra.mxu0 0.0
    %957 = vmatprep.subr.mxu0 0.0
    %958 = vmatpush1.msra.mxu0 0.0
    %959 = vmatprep.subr.mxu0 0.0
    %960 = vmatpush1.msra.mxu0 0.0
    %961 = vmatprep.subr.mxu0 0.0
    %962 = vmatpush1.msra.mxu0 0.0
    %963 = vmatprep.subr.mxu0 0.0
    %964 = vmatpush1.msra.mxu0 0.0
    %965 = vmatprep.subr.mxu0 0.0
    %966 = vmatpush1.msra.mxu0 0.0
    %967 = vmatprep.subr.mxu0 0.0
    %968 = vmatpush1.msra.mxu0 0.0
    %969 = vmatprep.subr.mxu0 0.0
    %970 = vmatpush1.msra.mxu0 0.0
    %971 = vmatprep.subr.mxu0 0.0
    %972 = vmatpush1.msra.mxu0 0.0
    %973 = vmatprep.subr.mxu0 0.0
    %974 = vmatpush1.msra.mxu0 0.0
    %975 = vmatprep.subr.mxu0 0.0
    %976 = vmatpush1.msra.mxu0 0.0
    %977 = vmatprep.subr.mxu0 0.0
    %978 = vmatpush1.msra.mxu0 0.0
    %979 = vmatprep.subr.mxu0 0.0
    %980 = vmatpush1.msra.mxu0 0.0
    %981 = vmatprep.subr.mxu0 0.0
    %982 = vmatpush1.msra.mxu0 0.0
    %983 = vmatprep.mubr.f32.mxu0 0.0
    %984 = vmatmul.mubr.f32.gmra.mrb[0].mxu0 %v917
    %v985 = vpop.f32.mrb[0].mxu0
    %v986 = vadd.f32 0.0, %v985
    %v987 = vpop.f32.mrb[0].mxu0
    %988 = vdwg.mxu0
    %v990 = vrot.slane %v986, 2
    %v992 = vadd.f32 %v163, %v990
    %v993 = vxor.u32 %v992, 2147483648
    %v994 = vmul.f32 %v993, 1.442695
    %v995 = vpow.pop %v994
    %v996 = vadd.f32 %v995, 1.0
    %v997 = vrcp.pop %v996
    %v998 = vmul.f32 1.0, %v997
    %v999 = vmul.f32 %v998, 2.0
    %v1000 = vsub.f32 %v999, 1.0
    %v1002 = vrot.slane %v906, 6
    %v1004 = vmul.f32 %v998, %v1002
    %1006 = vrot.lane.b32.xlu0 %v1000, 64
    %v1007 = vpop.permute.xlu0 %1006
    %v1009 = vmul.f32 %v998, %v1007
    %1011 = vrot.lane.b32.xlu0 %v1009, 32
    %v1012 = vpop.permute.xlu0 %1011
    %v1014 = vadd.f32 %v1004, %v1012
    %v1015 = vtanh.pop %v1014
    %1017 = vrot.lane.b32.xlu0 %v1015, 64
    %v1018 = vpop.permute.xlu0 %1017
    %v1020 = vmul.f32 %v998, %v1018
    %v1022 = vrot.slane %v1020, 6
    %v1023 = vld [vmem:[%s4] sm:$0xff]
    %v1024 = vld [vmem:[%s4 + $0x8] sm:$0xff]
    %v1025 = vld [vmem:[%s4 + $0x10] sm:$0xff]
    %v1026 = vld [vmem:[%s4 + $0x18] sm:$0xff]
    %v1027 = vld [vmem:[%s5] sm:$0x1]
    %v1029 = vlaneseq
    %v1030 = vshrl.u32 %v1029, 7
    %v1031 = vsub.s32 0, %v1030
    %v1032 = vrot.slane %v1027, %v1031
    %v1034 = vcombine.low %v269, %v378
    %v1035 = vcombine.low %v486, %v594
    %v1037 = vunpack.c.l.s4 1983009808
    %v1038 = vunpack.c.0.s8 %v1037
    %v1039 = vlaneseq
    %v1040 = vshrl.u32 %v1039, 7
    %v1041 = vsub.s32 %v1038, %v1040
    %v1042 = vrot.slane %v1034, %v1041
    %v1044 = vunpack.c.l.s4 1983009808
    %v1045 = vunpack.c.0.s8 %v1044
    %v1046 = vlaneseq
    %v1047 = vshrl.u32 %v1046, 7
    %v1048 = vsub.s32 %v1045, %v1047
    %v1049 = vrot.slane %v1035, %v1048
    %v1050 = vcombine.low %v1042, %v1049
    %v1051 = vcombine.low %v697, %v806
    %v1052 = vcombine.low %v914, %v1022
    %v1054 = vunpack.c.l.s4 1983009808
    %v1055 = vunpack.c.0.s8 %v1054
    %v1056 = vlaneseq
    %v1057 = vshrl.u32 %v1056, 7
    %v1058 = vsub.s32 %v1055, %v1057
    %v1059 = vrot.slane %v1051, %v1058
    %v1061 = vunpack.c.l.s4 1983009808
    %v1062 = vunpack.c.0.s8 %v1061
    %v1063 = vlaneseq
    %v1064 = vshrl.u32 %v1063, 7
    %v1065 = vsub.s32 %v1062, %v1064
    %v1066 = vrot.slane %v1052, %v1065
    %v1067 = vcombine.low %v1059, %v1066
    %1068 = vrot.lane.b32.xlu0 %v1050, 32
    %v1069 = vpop.permute.xlu0 %1068
    %1070 = vrot.lane.b32.xlu0 %v1067, 32
    %v1071 = vpop.permute.xlu0 %1070
    %v1072 = vsel %vm170, %v1069, 0
    %v1074 = vsel %vm170, %v1071, 0
    %1076 = vmatprep.subr.mxu0 0.0
    %1077 = vmatpush1.msra.mxu0 %v1023
    %1078 = vmatprep.subr.mxu0 0.0
    %1079 = vmatpush1.msra.mxu0 %v1024
    %1080 = vmatprep.subr.mxu0 0.0
    %1081 = vmatpush1.msra.mxu0 %v1025
    %1082 = vmatprep.subr.mxu0 0.0
    %1083 = vmatpush1.msra.mxu0 %v1026
    %1084 = vmatprep.subr.mxu0 0.0
    %1085 = vmatpush1.msra.mxu0 0.0
    %1086 = vmatprep.subr.mxu0 0.0
    %1087 = vmatpush1.msra.mxu0 0.0
    %1088 = vmatprep.subr.mxu0 0.0
    %1089 = vmatpush1.msra.mxu0 0.0
    %1090 = vmatprep.subr.mxu0 0.0
    %1091 = vmatpush1.msra.mxu0 0.0
    %1092 = vmatprep.subr.mxu0 0.0
    %1093 = vmatpush1.msra.mxu0 0.0
    %1094 = vmatprep.subr.mxu0 0.0
    %1095 = vmatpush1.msra.mxu0 0.0
    %1096 = vmatprep.subr.mxu0 0.0
    %1097 = vmatpush1.msra.mxu0 0.0
    %1098 = vmatprep.subr.mxu0 0.0
    %1099 = vmatpush1.msra.mxu0 0.0
    %1100 = vmatprep.subr.mxu0 0.0
    %1101 = vmatpush1.msra.mxu0 0.0
    %1102 = vmatprep.subr.mxu0 0.0
    %1103 = vmatpush1.msra.mxu0 0.0
    %1104 = vmatprep.subr.mxu0 0.0
    %1105 = vmatpush1.msra.mxu0 0.0
    %1106 = vmatprep.subr.mxu0 0.0
    %1107 = vmatpush1.msra.mxu0 0.0
    %1108 = vmatprep.subr.mxu0 0.0
    %1109 = vmatpush1.msra.mxu0 0.0
    %1110 = vmatprep.subr.mxu0 0.0
    %1111 = vmatpush1.msra.mxu0 0.0
    %1112 = vmatprep.subr.mxu0 0.0
    %1113 = vmatpush1.msra.mxu0 0.0
    %1114 = vmatprep.subr.mxu0 0.0
    %1115 = vmatpush1.msra.mxu0 0.0
    %1116 = vmatprep.subr.mxu0 0.0
    %1117 = vmatpush1.msra.mxu0 0.0
    %1118 = vmatprep.subr.mxu0 0.0
    %1119 = vmatpush1.msra.mxu0 0.0
    %1120 = vmatprep.subr.mxu0 0.0
    %1121 = vmatpush1.msra.mxu0 0.0
    %1122 = vmatprep.subr.mxu0 0.0
    %1123 = vmatpush1.msra.mxu0 0.0
    %1124 = vmatprep.subr.mxu0 0.0
    %1125 = vmatpush1.msra.mxu0 0.0
    %1126 = vmatprep.subr.mxu0 0.0
    %1127 = vmatpush1.msra.mxu0 0.0
    %1128 = vmatprep.subr.mxu0 0.0
    %1129 = vmatpush1.msra.mxu0 0.0
    %1130 = vmatprep.subr.mxu0 0.0
    %1131 = vmatpush1.msra.mxu0 0.0
    %1132 = vmatprep.subr.mxu0 0.0
    %1133 = vmatpush1.msra.mxu0 0.0
    %1134 = vmatprep.subr.mxu0 0.0
    %1135 = vmatpush1.msra.mxu0 0.0
    %1136 = vmatprep.subr.mxu0 0.0
    %1137 = vmatpush1.msra.mxu0 0.0
    %1138 = vmatprep.subr.mxu0 0.0
    %1139 = vmatpush1.msra.mxu0 0.0
    %1140 = vmatprep.mubr.f32.mxu0 0.0
    %1141 = vmatmul.mubr.f32.gmra.mrb[0].mxu0 %v1072
    %v1142 = vpop.f32.mrb[0].mxu0
    %v1143 = vadd.f32 %v1032, %v1142
    %v1144 = vpop.f32.mrb[0].mxu0
    %1145 = vmatprep.mubr.f32.mxu0 0.0
    %1146 = vmatmul.mubr.f32.gmra.mrb[0].mxu0 %v1074
    %v1147 = vpop.f32.mrb[0].mxu0
    %v1148 = vadd.f32 %v1032, %v1147
    %v1149 = vpop.f32.mrb[0].mxu0
    %1150 = vdwg.mxu0
    %v1151 = vxor.u32 %v1143, 2147483648
    %v1152 = vxor.u32 %v1148, 2147483648
    %v1153 = vmul.f32 %v1151, 1.442695
    %v1154 = vpow.pop %v1153
    %v1155 = vmul.f32 %v1152, 1.442695
    %v1156 = vpow.pop %v1155
    %v1157 = vadd.f32 %v1154, 1.0
    %v1158 = vadd.f32 %v1156, 1.0
    %v1159 = vrcp.pop %v1157
    %v1160 = vmul.f32 1.0, %v1159
    %v1161 = vrcp.pop %v1158
    %v1162 = vmul.f32 1.0, %v1161
    %v1165 = vcombine.high %v1160, %v1160
    %v1167 = vunpack.c.l.s4 1983009808
    %v1168 = vunpack.c.0.s8 %v1167
    %v1169 = vlaneseq
    %v1170 = vshrl.u32 %v1169, 7
    %v1171 = vsub.s32 %v1168, %v1170
    %v1172 = vrot.slane %v1160, %v1171
    %v1174 = vunpack.c.l.s4 1983009808
    %v1175 = vunpack.c.0.s8 %v1174
    %v1176 = vlaneseq
    %v1177 = vshrl.u32 %v1176, 7
    %v1178 = vsub.s32 %v1175, %v1177
    %v1179 = vrot.slane %v1165, %v1178
    %v1180 = vcombine.high %v1172, %v1172
    %v1181 = vcombine.high %v1179, %v1179
    %v1182 = vcombine.high %v1162, %v1162
    %v1184 = vunpack.c.l.s4 1983009808
    %v1185 = vunpack.c.0.s8 %v1184
    %v1186 = vlaneseq
    %v1187 = vshrl.u32 %v1186, 7
    %v1188 = vsub.s32 %v1185, %v1187
    %v1189 = vrot.slane %v1162, %v1188
    %v1191 = vunpack.c.l.s4 1983009808
    %v1192 = vunpack.c.0.s8 %v1191
    %v1193 = vlaneseq
    %v1194 = vshrl.u32 %v1193, 7
    %v1195 = vsub.s32 %v1192, %v1194
    %v1196 = vrot.slane %v1182, %v1195
    %v1197 = vcombine.high %v1189, %v1189
    %v1198 = vcombine.high %v1196, %v1196
    %vm1207 = vcmask 58368
    %1208 = vst.msk [vmem:[#allocation2] sm:$0x3] %vm1207, %v1172
    %1209 = vst.msk [vmem:[#allocation2 + $0x2] sm:$0x3] %vm1207, %v1180
    %1210 = vst.msk [vmem:[#allocation2 + $0x4] sm:$0x3] %vm1207, %v1179
    %1211 = vst.msk [vmem:[#allocation2 + $0x6] sm:$0x3] %vm1207, %v1181
    %1212 = vst.msk [vmem:[#allocation2 + $0x8] sm:$0x3] %vm1207, %v1189
    %1213 = vst.msk [vmem:[#allocation2 + $0xa] sm:$0x3] %vm1207, %v1197
    %1214 = vst.msk [vmem:[#allocation2 + $0xc] sm:$0x3] %vm1207, %v1196
    %1215 = vst.msk [vmem:[#allocation2 + $0xe] sm:$0x3] %vm1207, %v1198
    // Predicated region
    $region26: #{tpu_custom_call.1} parent=1 // pred_check
      _
    $region27: #{tpu_custom_call.1} parent=1 // pred_check_branch
      %1217 = sbr.rel (0) target = $region29
    $region28: #{tpu_custom_call.1} parent=1 // pred_region
      %s1219 = ssub.s32 256, 256
      %1220 = vsyncadd [#allocation3], %s1219
      %s1221 = sshll.u32 [#allocation2], 4
      %s1222 = int_to_ptr.vmem [resolvable:$true] %s1221
      %1227 = dma.vmem_to_hbm [thread:$0]  %s1222, 256, %s6, [#allocation3], 32, 32, 2
    $region29: #{tpu_custom_call.1} parent=1 // pred_fallthru
      _
    // Predicated region
    $region30: #{tpu_custom_call.1} parent=1 // pred_check
      _
    $region31: #{tpu_custom_call.1} parent=1 // pred_check_branch
      %1229 = sbr.rel (0) target = $region33
    $region32: #{tpu_custom_call.1} parent=1 // pred_region
      %1230 = dma.done [#allocation3], 256
    $region33: #{tpu_custom_call.1} parent=1 // pred_fallthru
      _
    %1231 = vsyncpa [#allocation3], 1

</llo_original>
